<compile_context>
chip_gen: v5e
topology: v5e:2x2
jax: 0.10.0
libtpu: 0.0.40
codegen_flags: <defaults>
</compile_context>

<pallas_src>
import functools

import numpy as np

import jax
import jax.numpy as jnp
from jax.experimental import pallas as pl
from jax.experimental.pallas import tpu as pltpu


# Static module configuration (cfg defaults of CNNFeatureExtractor).
KERNELS = (16, 32, 64)
K_SIZES = (5, 5, 3)
S_SIZES = (3, 3, 1)


def _conv_out_dims(h, w):
    k1, k2, k3 = K_SIZES
    s1, s2, s3 = S_SIZES
    oh1 = (h - k1) // s1 + 1
    ow1 = (w - k1) // s1 + 1
    oh2 = (oh1 - k2) // s2 + 1
    ow2 = (ow1 - k2) // s2 + 1
    oh3 = (oh2 - k3) // s3 + 1
    ow3 = (ow2 - k3) // s3 + 1
    return oh1, ow1, oh2, ow2, oh3, ow3


# ----------------------------------------------------------------------------
# Fused Pallas kernel: conv1 + ReLU + conv2 + ReLU + conv3 + ReLU + fc1
# ----------------------------------------------------------------------------
def _fused_cnn_kernel(p_ref, w1_ref, b1_ref, w2_ref, b2_ref, w3_ref, b3_ref,
                      wf_ref, bf_ref, o_ref, a2_ref, *,
                      batch, m2, kk2, ow2, oh3, ow3, k3, s3):
    """All activations stay in VMEM.

    p_ref : (kk2 * m2, Kpad) conv1 im2col patches; rows ordered
            (conv2 kernel pos p=(i2,j2), conv2 out y, conv2 out x, batch);
            columns are the (c, kh1, kw1) conv1 patch, zero-padded to Kpad.
    w1_ref: (Kpad, C1)        conv1 weight, rows (c, kh1, kw1), zero-padded.
    w2_ref: (kk2 * C1, C2)    conv2 weight, rows (kh2, kw2, c1).
    w3_ref: (k3*k3*C2, C3)    conv3 weight, rows (kh3, kw3, c2).
    wf_ref: (oh3*ow3*C3, H)   fc1 weight, rows (y3, x3, c3).
    o_ref : (batch, H)        embedding output.
    a2_ref: (m2, C2)          VMEM scratch: conv2 activations, rows (y2, x2, b).
    """
    c1 = w1_ref.shape[1]
    c2 = w2_ref.shape[1]
    c3 = w3_ref.shape[1]

    w1 = w1_ref[...]
    b1 = b1_ref[...]

    # ---- conv1 + ReLU + conv2 (pre-bias): loop over conv2 kernel positions.
    acc2 = jnp.zeros((m2, c2), jnp.float32)
    for p in range(kk2):
        patches = p_ref[pl.ds(p * m2, m2), :]                       # (m2, Kpad)
        a1 = jnp.maximum(
            jnp.dot(patches, w1, preferred_element_type=jnp.float32) + b1, 0.0)
        w2_p = w2_ref[pl.ds(p * c1, c1), :]                         # (C1, C2)
        acc2 = acc2 + jnp.dot(a1, w2_p, preferred_element_type=jnp.float32)
    a2_ref[...] = jnp.maximum(acc2 + b2_ref[...], 0.0)              # (m2, C2)

    # ---- conv3 + ReLU + fc1: loop over conv3 output & kernel positions.
    accf = jnp.zeros((batch, wf_ref.shape[1]), jnp.float32)
    for oy3 in range(oh3):
        for ox3 in range(ow3):
            acc3 = jnp.zeros((batch, c3), jnp.float32)
            for i3 in range(k3):
                for j3 in range(k3):
                    q = (oy3 * s3 + i3) * ow2 + (ox3 * s3 + j3)
                    a2_q = a2_ref[pl.ds(q * batch, batch), :]       # (B, C2)
                    w3_q = w3_ref[pl.ds((i3 * k3 + j3) * c2, c2), :]
                    acc3 = acc3 + jnp.dot(a2_q, w3_q,
                                          preferred_element_type=jnp.float32)
            a3 = jnp.maximum(acc3 + b3_ref[...], 0.0)               # (B, C3)
            wf_blk = wf_ref[pl.ds((oy3 * ow3 + ox3) * c3, c3), :]   # (C3, H)
            accf = accf + jnp.dot(a3, wf_blk,
                                  preferred_element_type=jnp.float32)
    o_ref[...] = (accf + bf_ref[...]).astype(o_ref.dtype)


# ----------------------------------------------------------------------------
# Static (numpy, trace-time) im2col gather index for conv1, grouped for conv2.
# ----------------------------------------------------------------------------
def _build_patch_index(batch, ch, h, w, kpad):
    k1, k2, _ = K_SIZES
    s1, s2, _ = S_SIZES
    _, _, oh2, ow2, _, _ = _conv_out_dims(h, w)
    i2 = np.arange(k2).reshape(k2, 1, 1, 1, 1, 1, 1, 1)
    j2 = np.arange(k2).reshape(1, k2, 1, 1, 1, 1, 1, 1)
    oy = np.arange(oh2).reshape(1, 1, oh2, 1, 1, 1, 1, 1)
    ox = np.arange(ow2).reshape(1, 1, 1, ow2, 1, 1, 1, 1)
    b = np.arange(batch).reshape(1, 1, 1, 1, batch, 1, 1, 1)
    c = np.arange(ch).reshape(1, 1, 1, 1, 1, ch, 1, 1)
    di = np.arange(k1).reshape(1, 1, 1, 1, 1, 1, k1, 1)
    dj = np.arange(k1).reshape(1, 1, 1, 1, 1, 1, 1, k1)
    hh = (oy * s2 + i2) * s1 + di          # input row
    ww = (ox * s2 + j2) * s1 + dj          # input col
    flat = ((b * ch + c) * h + hh) * w + ww  # (k2,k2,oh2,ow2,B,C,k1,k1)
    idx = flat.reshape(k2 * k2 * oh2 * ow2 * batch, ch * k1 * k1).astype(np.int32)
    pad = np.zeros((idx.shape[0], kpad - idx.shape[1]), np.int32)  # dummy idx 0
    return np.concatenate([idx, pad], axis=1)


# ----------------------------------------------------------------------------
# Parameter init (torch layout) + one-time packing into matmul layout
# ----------------------------------------------------------------------------
def _init_conv(key, oc, ic, kh, kw):
    k1, k2 = jax.random.split(key)
    bound = 1.0 / jnp.sqrt(ic * kh * kw)
    wgt = jax.random.uniform(k1, (oc, ic, kh, kw), jnp.float32, -bound, bound)
    b = jax.random.uniform(k2, (oc,), jnp.float32, -bound, bound)
    return wgt, b


def _init_linear(key, in_f, out_f):
    k1, k2 = jax.random.split(key)
    bound = 1.0 / jnp.sqrt(in_f)
    wgt = jax.random.uniform(k1, (out_f, in_f), jnp.float32, -bound, bound)
    b = jax.random.uniform(k2, (out_f,), jnp.float32, -bound, bound)
    return wgt, b


def make_params(key, ch, n, m, hidden0):
    """Raw torch-layout parameters (used by the reference and for packing)."""
    c1, c2, c3 = KERNELS
    k1, k2, k3 = K_SIZES
    ks = jax.random.split(key, 4)
    w1, b1 = _init_conv(ks[0], c1, ch, k1, k1)
    w2, b2 = _init_conv(ks[1], c2, c1, k2, k2)
    w3, b3 = _init_conv(ks[2], c3, c2, k3, k3)
    _, _, _, _, oh3, ow3 = _conv_out_dims(n, m)
    out_feat = c3 * oh3 * ow3
    wf, bf = _init_linear(ks[3], out_feat, hidden0)
    return dict(conv1=(w1, b1), conv2=(w2, b2), conv3=(w3, b3), fc1=(wf, bf))


def pack_params(raw, n, m):
    """Hoisted out of the forward path: pack weights into (K, N) matmul layout."""
    c1, c2, c3 = KERNELS
    k1, k2, k3 = K_SIZES
    w1, b1 = raw["conv1"]
    w2, b2 = raw["conv2"]
    w3, b3 = raw["conv3"]
    wf, bf = raw["fc1"]
    ch = w1.shape[1]
    hidden = wf.shape[0]
    _, _, _, _, oh3, ow3 = _conv_out_dims(n, m)

    kdim = ch * k1 * k1
    kpad = ((kdim + 127) // 128) * 128  # lane-dense contraction dim
    w1p = jnp.pad(w1.reshape(c1, kdim).T, ((0, kpad - kdim), (0, 0)))
    w2p = w2.transpose(2, 3, 1, 0).reshape(k2 * k2 * c1, c2)   # rows (kh,kw,cin)
    w3p = w3.transpose(2, 3, 1, 0).reshape(k3 * k3 * c2, c3)   # rows (kh,kw,cin)
    # fc1 rows reordered to (y3, x3, c3) to match the in-kernel conv3 layout.
    wfp = wf.reshape(hidden, c3, oh3, ow3).transpose(2, 3, 1, 0)
    wfp = wfp.reshape(oh3 * ow3 * c3, hidden)
    return dict(w1p=w1p, b1p=b1.reshape(1, c1),
                w2p=w2p, b2p=b2.reshape(1, c2),
                w3p=w3p, b3p=b3.reshape(1, c3),
                wfp=wfp, bfp=bf.reshape(1, hidden))


# ----------------------------------------------------------------------------
# Forward pass (matches CNNFeatureExtractor.forward, recurrent=False)
# ----------------------------------------------------------------------------
def cnn_feature_extractor_forward(packed, obs):
    """obs: (B, C, H, W) float32 NCHW. Returns (embedding, None)."""
    batch, ch, h, w = obs.shape
    k1, k2, k3 = K_SIZES
    _, _, s3 = S_SIZES
    _, _, oh2, ow2, oh3, ow3 = _conv_out_dims(h, w)
    m2 = oh2 * ow2 * batch
    kk2 = k2 * k2
    c2 = packed["w2p"].shape[1]
    hidden = packed["wfp"].shape[1]
    kpad = packed["w1p"].shape[0]

    # Single static gather: conv1 im2col, rows grouped by conv2 kernel position.
    idx = _build_patch_index(batch, ch, h, w, kpad)
    patches = jnp.take(obs.reshape(-1), jnp.asarray(idx), axis=0)  # (kk2*m2, kpad)

    kernel = functools.partial(
        _fused_cnn_kernel, batch=batch, m2=m2, kk2=kk2, ow2=ow2,
        oh3=oh3, ow3=ow3, k3=k3, s3=s3)

    vmem_spec = pl.BlockSpec(memory_space=pltpu.MemorySpace.VMEM)
    emb = pl.pallas_call(
        kernel,
        out_shape=jax.ShapeDtypeStruct((batch, hidden), jnp.float32),
        in_specs=[vmem_spec] * 9,
        out_specs=vmem_spec,
        scratch_shapes=[pltpu.VMEM((m2, c2), jnp.float32)],
    )(patches,
      packed["w1p"], packed["b1p"],
      packed["w2p"], packed["b2p"],
      packed["w3p"], packed["b3p"],
      packed["wfp"], packed["bfp"])
    return emb, None


# Pure-JAX reference (same math via lax.conv, f32 precision) for the self-check.
def _reference_forward(raw, obs):
    x = obs
    for name, st in zip(("conv1", "conv2", "conv3"), S_SIZES):
        wgt, b = raw[name]
        x = jax.lax.conv_general_dilated(
            x, wgt, window_strides=(st, st), padding="VALID",
            dimension_numbers=("NCHW", "OIHW", "NCHW"),
            precision=jax.lax.Precision.HIGHEST)
        x = jnp.maximum(x + b[None, :, None, None], 0.0)
    x = x.reshape(x.shape[0], -1)
    wf, bf = raw["fc1"]
    return jnp.dot(x, wf.T, precision=jax.lax.Precision.HIGHEST) + bf


if __name__ == "__main__":
    # obs_space['image'] = [36, 36, 3]  -> NCHW input (B=2, C=3, H=36, W=36)
    B, C, H, W = 2, 3, 36, 36
    HIDDEN0 = 32

    key = jax.random.PRNGKey(0)
    k_obs, k_par = jax.random.split(key)
    obs = jax.random.uniform(k_obs, (B, C, H, W), jnp.float32)

    raw_params = make_params(k_par, C, H, W, HIDDEN0)
    packed_params = pack_params(raw_params, H, W)   # one-time weight packing

    fwd = jax.jit(cnn_feature_extractor_forward)
    emb, mem = fwd(packed_params, obs)
    emb = jax.block_until_ready(emb)
    assert emb.shape == (B, HIDDEN0), emb.shape
    assert mem is None

    ref = _reference_forward(raw_params, obs)
    err = float(jnp.max(jnp.abs(emb - ref)))
    assert jnp.allclose(emb, ref, atol=1e-3, rtol=1e-3), err

    print("KERNEL_OK")
</pallas_src>

<mosaic_0001>
module attributes {stable_mosaic.version = 11 : i64} {
  func.func @_fused_cnn_kernel(%arg0: memref<450x128xf32, #tpu.memory_space<vmem>>, %arg1: memref<128x16xf32, #tpu.memory_space<vmem>>, %arg2: memref<1x16xf32, #tpu.memory_space<vmem>>, %arg3: memref<400x32xf32, #tpu.memory_space<vmem>>, %arg4: memref<1x32xf32, #tpu.memory_space<vmem>>, %arg5: memref<288x64xf32, #tpu.memory_space<vmem>>, %arg6: memref<1x64xf32, #tpu.memory_space<vmem>>, %arg7: memref<64x32xf32, #tpu.memory_space<vmem>>, %arg8: memref<1x32xf32, #tpu.memory_space<vmem>>, %arg9: memref<2x32xf32, #tpu.memory_space<vmem>>, %arg10: memref<18x32xf32, #tpu.memory_space<vmem>>) attributes {dimension_semantics = [], scalar_prefetch = 0 : i64, scratch_operands = 1 : i64, tpu.core_type = #tpu.core_type<tc>} {
    %c0 = arith.constant 0 : index
    %c0_0 = arith.constant 0 : index
    %0 = vector.load %arg1[%c0, %c0_0] : memref<128x16xf32, #tpu.memory_space<vmem>>, vector<128x16xf32>
    %c0_1 = arith.constant 0 : index
    %c0_2 = arith.constant 0 : index
    %1 = vector.load %arg2[%c0_1, %c0_2] : memref<1x16xf32, #tpu.memory_space<vmem>>, vector<1x16xf32>
    %cst = arith.constant 0.000000e+00 : f32
    %2 = vector.broadcast %cst : f32 to vector<18x32xf32>
    %c0_3 = arith.constant 0 : index
    %c0_4 = arith.constant 0 : index
    %3 = vector.load %arg0[%c0_3, %c0_4] : memref<450x128xf32, #tpu.memory_space<vmem>>, vector<18x128xf32>
    %cst_5 = arith.constant dense<0.000000e+00> : vector<18x16xf32>
    %4 = tpu.matmul %3, %0, %cst_5 {dimension_numbers = #tpu.dot_dimension_numbers<[1], [0], [0], [1], [0, 0, 1, 1], [], []>} : vector<18x128xf32>, vector<128x16xf32>, vector<18x16xf32> -> vector<18x16xf32>
    %5 = vector.broadcast %1 : vector<1x16xf32> to vector<18x16xf32>
    %6 = arith.addf %4, %5 : vector<18x16xf32>
    %cst_6 = arith.constant 0.000000e+00 : f32
    %7 = vector.broadcast %cst_6 : f32 to vector<18x16xf32>
    %8 = arith.maximumf %6, %7 : vector<18x16xf32>
    %c0_7 = arith.constant 0 : index
    %c0_8 = arith.constant 0 : index
    %9 = vector.load %arg3[%c0_7, %c0_8] : memref<400x32xf32, #tpu.memory_space<vmem>>, vector<16x32xf32>
    %cst_9 = arith.constant dense<0.000000e+00> : vector<18x32xf32>
    %10 = tpu.matmul %8, %9, %cst_9 {dimension_numbers = #tpu.dot_dimension_numbers<[1], [0], [0], [1], [0, 0, 1, 1], [], []>} : vector<18x16xf32>, vector<16x32xf32>, vector<18x32xf32> -> vector<18x32xf32>
    %11 = arith.addf %2, %10 : vector<18x32xf32>
    %c18 = arith.constant 18 : index
    %c0_10 = arith.constant 0 : index
    %12 = vector.load %arg0[%c18, %c0_10] : memref<450x128xf32, #tpu.memory_space<vmem>>, vector<18x128xf32>
    %cst_11 = arith.constant dense<0.000000e+00> : vector<18x16xf32>
    %13 = tpu.matmul %12, %0, %cst_11 {dimension_numbers = #tpu.dot_dimension_numbers<[1], [0], [0], [1], [0, 0, 1, 1], [], []>} : vector<18x128xf32>, vector<128x16xf32>, vector<18x16xf32> -> vector<18x16xf32>
    %14 = vector.broadcast %1 : vector<1x16xf32> to vector<18x16xf32>
    %15 = arith.addf %13, %14 : vector<18x16xf32>
    %cst_12 = arith.constant 0.000000e+00 : f32
    %16 = vector.broadcast %cst_12 : f32 to vector<18x16xf32>
    %17 = arith.maximumf %15, %16 : vector<18x16xf32>
    %c16 = arith.constant 16 : index
    %c0_13 = arith.constant 0 : index
    %18 = vector.load %arg3[%c16, %c0_13] : memref<400x32xf32, #tpu.memory_space<vmem>>, vector<16x32xf32>
    %cst_14 = arith.constant dense<0.000000e+00> : vector<18x32xf32>
    %19 = tpu.matmul %17, %18, %cst_14 {dimension_numbers = #tpu.dot_dimension_numbers<[1], [0], [0], [1], [0, 0, 1, 1], [], []>} : vector<18x16xf32>, vector<16x32xf32>, vector<18x32xf32> -> vector<18x32xf32>
    %20 = arith.addf %11, %19 : vector<18x32xf32>
    %c36 = arith.constant 36 : index
    %c0_15 = arith.constant 0 : index
    %21 = vector.load %arg0[%c36, %c0_15] : memref<450x128xf32, #tpu.memory_space<vmem>>, vector<18x128xf32>
    %cst_16 = arith.constant dense<0.000000e+00> : vector<18x16xf32>
    %22 = tpu.matmul %21, %0, %cst_16 {dimension_numbers = #tpu.dot_dimension_numbers<[1], [0], [0], [1], [0, 0, 1, 1], [], []>} : vector<18x128xf32>, vector<128x16xf32>, vector<18x16xf32> -> vector<18x16xf32>
    %23 = vector.broadcast %1 : vector<1x16xf32> to vector<18x16xf32>
    %24 = arith.addf %22, %23 : vector<18x16xf32>
    %cst_17 = arith.constant 0.000000e+00 : f32
    %25 = vector.broadcast %cst_17 : f32 to vector<18x16xf32>
    %26 = arith.maximumf %24, %25 : vector<18x16xf32>
    %c32 = arith.constant 32 : index
    %c0_18 = arith.constant 0 : index
    %27 = vector.load %arg3[%c32, %c0_18] : memref<400x32xf32, #tpu.memory_space<vmem>>, vector<16x32xf32>
    %cst_19 = arith.constant dense<0.000000e+00> : vector<18x32xf32>
    %28 = tpu.matmul %26, %27, %cst_19 {dimension_numbers = #tpu.dot_dimension_numbers<[1], [0], [0], [1], [0, 0, 1, 1], [], []>} : vector<18x16xf32>, vector<16x32xf32>, vector<18x32xf32> -> vector<18x32xf32>
    %29 = arith.addf %20, %28 : vector<18x32xf32>
    %c54 = arith.constant 54 : index
    %c0_20 = arith.constant 0 : index
    %30 = vector.load %arg0[%c54, %c0_20] : memref<450x128xf32, #tpu.memory_space<vmem>>, vector<18x128xf32>
    %cst_21 = arith.constant dense<0.000000e+00> : vector<18x16xf32>
    %31 = tpu.matmul %30, %0, %cst_21 {dimension_numbers = #tpu.dot_dimension_numbers<[1], [0], [0], [1], [0, 0, 1, 1], [], []>} : vector<18x128xf32>, vector<128x16xf32>, vector<18x16xf32> -> vector<18x16xf32>
    %32 = vector.broadcast %1 : vector<1x16xf32> to vector<18x16xf32>
    %33 = arith.addf %31, %32 : vector<18x16xf32>
    %cst_22 = arith.constant 0.000000e+00 : f32
    %34 = vector.broadcast %cst_22 : f32 to vector<18x16xf32>
    %35 = arith.maximumf %33, %34 : vector<18x16xf32>
    %c48 = arith.constant 48 : index
    %c0_23 = arith.constant 0 : index
    %36 = vector.load %arg3[%c48, %c0_23] : memref<400x32xf32, #tpu.memory_space<vmem>>, vector<16x32xf32>
    %cst_24 = arith.constant dense<0.000000e+00> : vector<18x32xf32>
    %37 = tpu.matmul %35, %36, %cst_24 {dimension_numbers = #tpu.dot_dimension_numbers<[1], [0], [0], [1], [0, 0, 1, 1], [], []>} : vector<18x16xf32>, vector<16x32xf32>, vector<18x32xf32> -> vector<18x32xf32>
    %38 = arith.addf %29, %37 : vector<18x32xf32>
    %c72 = arith.constant 72 : index
    %c0_25 = arith.constant 0 : index
    %39 = vector.load %arg0[%c72, %c0_25] : memref<450x128xf32, #tpu.memory_space<vmem>>, vector<18x128xf32>
    %cst_26 = arith.constant dense<0.000000e+00> : vector<18x16xf32>
    %40 = tpu.matmul %39, %0, %cst_26 {dimension_numbers = #tpu.dot_dimension_numbers<[1], [0], [0], [1], [0, 0, 1, 1], [], []>} : vector<18x128xf32>, vector<128x16xf32>, vector<18x16xf32> -> vector<18x16xf32>
    %41 = vector.broadcast %1 : vector<1x16xf32> to vector<18x16xf32>
    %42 = arith.addf %40, %41 : vector<18x16xf32>
    %cst_27 = arith.constant 0.000000e+00 : f32
    %43 = vector.broadcast %cst_27 : f32 to vector<18x16xf32>
    %44 = arith.maximumf %42, %43 : vector<18x16xf32>
    %c64 = arith.constant 64 : index
    %c0_28 = arith.constant 0 : index
    %45 = vector.load %arg3[%c64, %c0_28] : memref<400x32xf32, #tpu.memory_space<vmem>>, vector<16x32xf32>
    %cst_29 = arith.constant dense<0.000000e+00> : vector<18x32xf32>
    %46 = tpu.matmul %44, %45, %cst_29 {dimension_numbers = #tpu.dot_dimension_numbers<[1], [0], [0], [1], [0, 0, 1, 1], [], []>} : vector<18x16xf32>, vector<16x32xf32>, vector<18x32xf32> -> vector<18x32xf32>
    %47 = arith.addf %38, %46 : vector<18x32xf32>
    %c90 = arith.constant 90 : index
    %c0_30 = arith.constant 0 : index
    %48 = vector.load %arg0[%c90, %c0_30] : memref<450x128xf32, #tpu.memory_space<vmem>>, vector<18x128xf32>
    %cst_31 = arith.constant dense<0.000000e+00> : vector<18x16xf32>
    %49 = tpu.matmul %48, %0, %cst_31 {dimension_numbers = #tpu.dot_dimension_numbers<[1], [0], [0], [1], [0, 0, 1, 1], [], []>} : vector<18x128xf32>, vector<128x16xf32>, vector<18x16xf32> -> vector<18x16xf32>
    %50 = vector.broadcast %1 : vector<1x16xf32> to vector<18x16xf32>
    %51 = arith.addf %49, %50 : vector<18x16xf32>
    %cst_32 = arith.constant 0.000000e+00 : f32
    %52 = vector.broadcast %cst_32 : f32 to vector<18x16xf32>
    %53 = arith.maximumf %51, %52 : vector<18x16xf32>
    %c80 = arith.constant 80 : index
    %c0_33 = arith.constant 0 : index
    %54 = vector.load %arg3[%c80, %c0_33] : memref<400x32xf32, #tpu.memory_space<vmem>>, vector<16x32xf32>
    %cst_34 = arith.constant dense<0.000000e+00> : vector<18x32xf32>
    %55 = tpu.matmul %53, %54, %cst_34 {dimension_numbers = #tpu.dot_dimension_numbers<[1], [0], [0], [1], [0, 0, 1, 1], [], []>} : vector<18x16xf32>, vector<16x32xf32>, vector<18x32xf32> -> vector<18x32xf32>
    %56 = arith.addf %47, %55 : vector<18x32xf32>
    %c108 = arith.constant 108 : index
    %c0_35 = arith.constant 0 : index
    %57 = vector.load %arg0[%c108, %c0_35] : memref<450x128xf32, #tpu.memory_space<vmem>>, vector<18x128xf32>
    %cst_36 = arith.constant dense<0.000000e+00> : vector<18x16xf32>
    %58 = tpu.matmul %57, %0, %cst_36 {dimension_numbers = #tpu.dot_dimension_numbers<[1], [0], [0], [1], [0, 0, 1, 1], [], []>} : vector<18x128xf32>, vector<128x16xf32>, vector<18x16xf32> -> vector<18x16xf32>
    %59 = vector.broadcast %1 : vector<1x16xf32> to vector<18x16xf32>
    %60 = arith.addf %58, %59 : vector<18x16xf32>
    %cst_37 = arith.constant 0.000000e+00 : f32
    %61 = vector.broadcast %cst_37 : f32 to vector<18x16xf32>
    %62 = arith.maximumf %60, %61 : vector<18x16xf32>
    %c96 = arith.constant 96 : index
    %c0_38 = arith.constant 0 : index
    %63 = vector.load %arg3[%c96, %c0_38] : memref<400x32xf32, #tpu.memory_space<vmem>>, vector<16x32xf32>
    %cst_39 = arith.constant dense<0.000000e+00> : vector<18x32xf32>
    %64 = tpu.matmul %62, %63, %cst_39 {dimension_numbers = #tpu.dot_dimension_numbers<[1], [0], [0], [1], [0, 0, 1, 1], [], []>} : vector<18x16xf32>, vector<16x32xf32>, vector<18x32xf32> -> vector<18x32xf32>
    %65 = arith.addf %56, %64 : vector<18x32xf32>
    %c126 = arith.constant 126 : index
    %c0_40 = arith.constant 0 : index
    %66 = vector.load %arg0[%c126, %c0_40] : memref<450x128xf32, #tpu.memory_space<vmem>>, vector<18x128xf32>
    %cst_41 = arith.constant dense<0.000000e+00> : vector<18x16xf32>
    %67 = tpu.matmul %66, %0, %cst_41 {dimension_numbers = #tpu.dot_dimension_numbers<[1], [0], [0], [1], [0, 0, 1, 1], [], []>} : vector<18x128xf32>, vector<128x16xf32>, vector<18x16xf32> -> vector<18x16xf32>
    %68 = vector.broadcast %1 : vector<1x16xf32> to vector<18x16xf32>
    %69 = arith.addf %67, %68 : vector<18x16xf32>
    %cst_42 = arith.constant 0.000000e+00 : f32
    %70 = vector.broadcast %cst_42 : f32 to vector<18x16xf32>
    %71 = arith.maximumf %69, %70 : vector<18x16xf32>
    %c112 = arith.constant 112 : index
    %c0_43 = arith.constant 0 : index
    %72 = vector.load %arg3[%c112, %c0_43] : memref<400x32xf32, #tpu.memory_space<vmem>>, vector<16x32xf32>
    %cst_44 = arith.constant dense<0.000000e+00> : vector<18x32xf32>
    %73 = tpu.matmul %71, %72, %cst_44 {dimension_numbers = #tpu.dot_dimension_numbers<[1], [0], [0], [1], [0, 0, 1, 1], [], []>} : vector<18x16xf32>, vector<16x32xf32>, vector<18x32xf32> -> vector<18x32xf32>
    %74 = arith.addf %65, %73 : vector<18x32xf32>
    %c144 = arith.constant 144 : index
    %c0_45 = arith.constant 0 : index
    %75 = vector.load %arg0[%c144, %c0_45] : memref<450x128xf32, #tpu.memory_space<vmem>>, vector<18x128xf32>
    %cst_46 = arith.constant dense<0.000000e+00> : vector<18x16xf32>
    %76 = tpu.matmul %75, %0, %cst_46 {dimension_numbers = #tpu.dot_dimension_numbers<[1], [0], [0], [1], [0, 0, 1, 1], [], []>} : vector<18x128xf32>, vector<128x16xf32>, vector<18x16xf32> -> vector<18x16xf32>
    %77 = vector.broadcast %1 : vector<1x16xf32> to vector<18x16xf32>
    %78 = arith.addf %76, %77 : vector<18x16xf32>
    %cst_47 = arith.constant 0.000000e+00 : f32
    %79 = vector.broadcast %cst_47 : f32 to vector<18x16xf32>
    %80 = arith.maximumf %78, %79 : vector<18x16xf32>
    %c128 = arith.constant 128 : index
    %c0_48 = arith.constant 0 : index
    %81 = vector.load %arg3[%c128, %c0_48] : memref<400x32xf32, #tpu.memory_space<vmem>>, vector<16x32xf32>
    %cst_49 = arith.constant dense<0.000000e+00> : vector<18x32xf32>
    %82 = tpu.matmul %80, %81, %cst_49 {dimension_numbers = #tpu.dot_dimension_numbers<[1], [0], [0], [1], [0, 0, 1, 1], [], []>} : vector<18x16xf32>, vector<16x32xf32>, vector<18x32xf32> -> vector<18x32xf32>
    %83 = arith.addf %74, %82 : vector<18x32xf32>
    %c162 = arith.constant 162 : index
    %c0_50 = arith.constant 0 : index
    %84 = vector.load %arg0[%c162, %c0_50] : memref<450x128xf32, #tpu.memory_space<vmem>>, vector<18x128xf32>
    %cst_51 = arith.constant dense<0.000000e+00> : vector<18x16xf32>
    %85 = tpu.matmul %84, %0, %cst_51 {dimension_numbers = #tpu.dot_dimension_numbers<[1], [0], [0], [1], [0, 0, 1, 1], [], []>} : vector<18x128xf32>, vector<128x16xf32>, vector<18x16xf32> -> vector<18x16xf32>
    %86 = vector.broadcast %1 : vector<1x16xf32> to vector<18x16xf32>
    %87 = arith.addf %85, %86 : vector<18x16xf32>
    %cst_52 = arith.constant 0.000000e+00 : f32
    %88 = vector.broadcast %cst_52 : f32 to vector<18x16xf32>
    %89 = arith.maximumf %87, %88 : vector<18x16xf32>
    %c144_53 = arith.constant 144 : index
    %c0_54 = arith.constant 0 : index
    %90 = vector.load %arg3[%c144_53, %c0_54] : memref<400x32xf32, #tpu.memory_space<vmem>>, vector<16x32xf32>
    %cst_55 = arith.constant dense<0.000000e+00> : vector<18x32xf32>
    %91 = tpu.matmul %89, %90, %cst_55 {dimension_numbers = #tpu.dot_dimension_numbers<[1], [0], [0], [1], [0, 0, 1, 1], [], []>} : vector<18x16xf32>, vector<16x32xf32>, vector<18x32xf32> -> vector<18x32xf32>
    %92 = arith.addf %83, %91 : vector<18x32xf32>
    %c180 = arith.constant 180 : index
    %c0_56 = arith.constant 0 : index
    %93 = vector.load %arg0[%c180, %c0_56] : memref<450x128xf32, #tpu.memory_space<vmem>>, vector<18x128xf32>
    %cst_57 = arith.constant dense<0.000000e+00> : vector<18x16xf32>
    %94 = tpu.matmul %93, %0, %cst_57 {dimension_numbers = #tpu.dot_dimension_numbers<[1], [0], [0], [1], [0, 0, 1, 1], [], []>} : vector<18x128xf32>, vector<128x16xf32>, vector<18x16xf32> -> vector<18x16xf32>
    %95 = vector.broadcast %1 : vector<1x16xf32> to vector<18x16xf32>
    %96 = arith.addf %94, %95 : vector<18x16xf32>
    %cst_58 = arith.constant 0.000000e+00 : f32
    %97 = vector.broadcast %cst_58 : f32 to vector<18x16xf32>
    %98 = arith.maximumf %96, %97 : vector<18x16xf32>
    %c160 = arith.constant 160 : index
    %c0_59 = arith.constant 0 : index
    %99 = vector.load %arg3[%c160, %c0_59] : memref<400x32xf32, #tpu.memory_space<vmem>>, vector<16x32xf32>
    %cst_60 = arith.constant dense<0.000000e+00> : vector<18x32xf32>
    %100 = tpu.matmul %98, %99, %cst_60 {dimension_numbers = #tpu.dot_dimension_numbers<[1], [0], [0], [1], [0, 0, 1, 1], [], []>} : vector<18x16xf32>, vector<16x32xf32>, vector<18x32xf32> -> vector<18x32xf32>
    %101 = arith.addf %92, %100 : vector<18x32xf32>
    %c198 = arith.constant 198 : index
    %c0_61 = arith.constant 0 : index
    %102 = vector.load %arg0[%c198, %c0_61] : memref<450x128xf32, #tpu.memory_space<vmem>>, vector<18x128xf32>
    %cst_62 = arith.constant dense<0.000000e+00> : vector<18x16xf32>
    %103 = tpu.matmul %102, %0, %cst_62 {dimension_numbers = #tpu.dot_dimension_numbers<[1], [0], [0], [1], [0, 0, 1, 1], [], []>} : vector<18x128xf32>, vector<128x16xf32>, vector<18x16xf32> -> vector<18x16xf32>
    %104 = vector.broadcast %1 : vector<1x16xf32> to vector<18x16xf32>
    %105 = arith.addf %103, %104 : vector<18x16xf32>
    %cst_63 = arith.constant 0.000000e+00 : f32
    %106 = vector.broadcast %cst_63 : f32 to vector<18x16xf32>
    %107 = arith.maximumf %105, %106 : vector<18x16xf32>
    %c176 = arith.constant 176 : index
    %c0_64 = arith.constant 0 : index
    %108 = vector.load %arg3[%c176, %c0_64] : memref<400x32xf32, #tpu.memory_space<vmem>>, vector<16x32xf32>
    %cst_65 = arith.constant dense<0.000000e+00> : vector<18x32xf32>
    %109 = tpu.matmul %107, %108, %cst_65 {dimension_numbers = #tpu.dot_dimension_numbers<[1], [0], [0], [1], [0, 0, 1, 1], [], []>} : vector<18x16xf32>, vector<16x32xf32>, vector<18x32xf32> -> vector<18x32xf32>
    %110 = arith.addf %101, %109 : vector<18x32xf32>
    %c216 = arith.constant 216 : index
    %c0_66 = arith.constant 0 : index
    %111 = vector.load %arg0[%c216, %c0_66] : memref<450x128xf32, #tpu.memory_space<vmem>>, vector<18x128xf32>
    %cst_67 = arith.constant dense<0.000000e+00> : vector<18x16xf32>
    %112 = tpu.matmul %111, %0, %cst_67 {dimension_numbers = #tpu.dot_dimension_numbers<[1], [0], [0], [1], [0, 0, 1, 1], [], []>} : vector<18x128xf32>, vector<128x16xf32>, vector<18x16xf32> -> vector<18x16xf32>
    %113 = vector.broadcast %1 : vector<1x16xf32> to vector<18x16xf32>
    %114 = arith.addf %112, %113 : vector<18x16xf32>
    %cst_68 = arith.constant 0.000000e+00 : f32
    %115 = vector.broadcast %cst_68 : f32 to vector<18x16xf32>
    %116 = arith.maximumf %114, %115 : vector<18x16xf32>
    %c192 = arith.constant 192 : index
    %c0_69 = arith.constant 0 : index
    %117 = vector.load %arg3[%c192, %c0_69] : memref<400x32xf32, #tpu.memory_space<vmem>>, vector<16x32xf32>
    %cst_70 = arith.constant dense<0.000000e+00> : vector<18x32xf32>
    %118 = tpu.matmul %116, %117, %cst_70 {dimension_numbers = #tpu.dot_dimension_numbers<[1], [0], [0], [1], [0, 0, 1, 1], [], []>} : vector<18x16xf32>, vector<16x32xf32>, vector<18x32xf32> -> vector<18x32xf32>
    %119 = arith.addf %110, %118 : vector<18x32xf32>
    %c234 = arith.constant 234 : index
    %c0_71 = arith.constant 0 : index
    %120 = vector.load %arg0[%c234, %c0_71] : memref<450x128xf32, #tpu.memory_space<vmem>>, vector<18x128xf32>
    %cst_72 = arith.constant dense<0.000000e+00> : vector<18x16xf32>
    %121 = tpu.matmul %120, %0, %cst_72 {dimension_numbers = #tpu.dot_dimension_numbers<[1], [0], [0], [1], [0, 0, 1, 1], [], []>} : vector<18x128xf32>, vector<128x16xf32>, vector<18x16xf32> -> vector<18x16xf32>
    %122 = vector.broadcast %1 : vector<1x16xf32> to vector<18x16xf32>
    %123 = arith.addf %121, %122 : vector<18x16xf32>
    %cst_73 = arith.constant 0.000000e+00 : f32
    %124 = vector.broadcast %cst_73 : f32 to vector<18x16xf32>
    %125 = arith.maximumf %123, %124 : vector<18x16xf32>
    %c208 = arith.constant 208 : index
    %c0_74 = arith.constant 0 : index
    %126 = vector.load %arg3[%c208, %c0_74] : memref<400x32xf32, #tpu.memory_space<vmem>>, vector<16x32xf32>
    %cst_75 = arith.constant dense<0.000000e+00> : vector<18x32xf32>
    %127 = tpu.matmul %125, %126, %cst_75 {dimension_numbers = #tpu.dot_dimension_numbers<[1], [0], [0], [1], [0, 0, 1, 1], [], []>} : vector<18x16xf32>, vector<16x32xf32>, vector<18x32xf32> -> vector<18x32xf32>
    %128 = arith.addf %119, %127 : vector<18x32xf32>
    %c252 = arith.constant 252 : index
    %c0_76 = arith.constant 0 : index
    %129 = vector.load %arg0[%c252, %c0_76] : memref<450x128xf32, #tpu.memory_space<vmem>>, vector<18x128xf32>
    %cst_77 = arith.constant dense<0.000000e+00> : vector<18x16xf32>
    %130 = tpu.matmul %129, %0, %cst_77 {dimension_numbers = #tpu.dot_dimension_numbers<[1], [0], [0], [1], [0, 0, 1, 1], [], []>} : vector<18x128xf32>, vector<128x16xf32>, vector<18x16xf32> -> vector<18x16xf32>
    %131 = vector.broadcast %1 : vector<1x16xf32> to vector<18x16xf32>
    %132 = arith.addf %130, %131 : vector<18x16xf32>
    %cst_78 = arith.constant 0.000000e+00 : f32
    %133 = vector.broadcast %cst_78 : f32 to vector<18x16xf32>
    %134 = arith.maximumf %132, %133 : vector<18x16xf32>
    %c224 = arith.constant 224 : index
    %c0_79 = arith.constant 0 : index
    %135 = vector.load %arg3[%c224, %c0_79] : memref<400x32xf32, #tpu.memory_space<vmem>>, vector<16x32xf32>
    %cst_80 = arith.constant dense<0.000000e+00> : vector<18x32xf32>
    %136 = tpu.matmul %134, %135, %cst_80 {dimension_numbers = #tpu.dot_dimension_numbers<[1], [0], [0], [1], [0, 0, 1, 1], [], []>} : vector<18x16xf32>, vector<16x32xf32>, vector<18x32xf32> -> vector<18x32xf32>
    %137 = arith.addf %128, %136 : vector<18x32xf32>
    %c270 = arith.constant 270 : index
    %c0_81 = arith.constant 0 : index
    %138 = vector.load %arg0[%c270, %c0_81] : memref<450x128xf32, #tpu.memory_space<vmem>>, vector<18x128xf32>
    %cst_82 = arith.constant dense<0.000000e+00> : vector<18x16xf32>
    %139 = tpu.matmul %138, %0, %cst_82 {dimension_numbers = #tpu.dot_dimension_numbers<[1], [0], [0], [1], [0, 0, 1, 1], [], []>} : vector<18x128xf32>, vector<128x16xf32>, vector<18x16xf32> -> vector<18x16xf32>
    %140 = vector.broadcast %1 : vector<1x16xf32> to vector<18x16xf32>
    %141 = arith.addf %139, %140 : vector<18x16xf32>
    %cst_83 = arith.constant 0.000000e+00 : f32
    %142 = vector.broadcast %cst_83 : f32 to vector<18x16xf32>
    %143 = arith.maximumf %141, %142 : vector<18x16xf32>
    %c240 = arith.constant 240 : index
    %c0_84 = arith.constant 0 : index
    %144 = vector.load %arg3[%c240, %c0_84] : memref<400x32xf32, #tpu.memory_space<vmem>>, vector<16x32xf32>
    %cst_85 = arith.constant dense<0.000000e+00> : vector<18x32xf32>
    %145 = tpu.matmul %143, %144, %cst_85 {dimension_numbers = #tpu.dot_dimension_numbers<[1], [0], [0], [1], [0, 0, 1, 1], [], []>} : vector<18x16xf32>, vector<16x32xf32>, vector<18x32xf32> -> vector<18x32xf32>
    %146 = arith.addf %137, %145 : vector<18x32xf32>
    %c288 = arith.constant 288 : index
    %c0_86 = arith.constant 0 : index
    %147 = vector.load %arg0[%c288, %c0_86] : memref<450x128xf32, #tpu.memory_space<vmem>>, vector<18x128xf32>
    %cst_87 = arith.constant dense<0.000000e+00> : vector<18x16xf32>
    %148 = tpu.matmul %147, %0, %cst_87 {dimension_numbers = #tpu.dot_dimension_numbers<[1], [0], [0], [1], [0, 0, 1, 1], [], []>} : vector<18x128xf32>, vector<128x16xf32>, vector<18x16xf32> -> vector<18x16xf32>
    %149 = vector.broadcast %1 : vector<1x16xf32> to vector<18x16xf32>
    %150 = arith.addf %148, %149 : vector<18x16xf32>
    %cst_88 = arith.constant 0.000000e+00 : f32
    %151 = vector.broadcast %cst_88 : f32 to vector<18x16xf32>
    %152 = arith.maximumf %150, %151 : vector<18x16xf32>
    %c256 = arith.constant 256 : index
    %c0_89 = arith.constant 0 : index
    %153 = vector.load %arg3[%c256, %c0_89] : memref<400x32xf32, #tpu.memory_space<vmem>>, vector<16x32xf32>
    %cst_90 = arith.constant dense<0.000000e+00> : vector<18x32xf32>
    %154 = tpu.matmul %152, %153, %cst_90 {dimension_numbers = #tpu.dot_dimension_numbers<[1], [0], [0], [1], [0, 0, 1, 1], [], []>} : vector<18x16xf32>, vector<16x32xf32>, vector<18x32xf32> -> vector<18x32xf32>
    %155 = arith.addf %146, %154 : vector<18x32xf32>
    %c306 = arith.constant 306 : index
    %c0_91 = arith.constant 0 : index
    %156 = vector.load %arg0[%c306, %c0_91] : memref<450x128xf32, #tpu.memory_space<vmem>>, vector<18x128xf32>
    %cst_92 = arith.constant dense<0.000000e+00> : vector<18x16xf32>
    %157 = tpu.matmul %156, %0, %cst_92 {dimension_numbers = #tpu.dot_dimension_numbers<[1], [0], [0], [1], [0, 0, 1, 1], [], []>} : vector<18x128xf32>, vector<128x16xf32>, vector<18x16xf32> -> vector<18x16xf32>
    %158 = vector.broadcast %1 : vector<1x16xf32> to vector<18x16xf32>
    %159 = arith.addf %157, %158 : vector<18x16xf32>
    %cst_93 = arith.constant 0.000000e+00 : f32
    %160 = vector.broadcast %cst_93 : f32 to vector<18x16xf32>
    %161 = arith.maximumf %159, %160 : vector<18x16xf32>
    %c272 = arith.constant 272 : index
    %c0_94 = arith.constant 0 : index
    %162 = vector.load %arg3[%c272, %c0_94] : memref<400x32xf32, #tpu.memory_space<vmem>>, vector<16x32xf32>
    %cst_95 = arith.constant dense<0.000000e+00> : vector<18x32xf32>
    %163 = tpu.matmul %161, %162, %cst_95 {dimension_numbers = #tpu.dot_dimension_numbers<[1], [0], [0], [1], [0, 0, 1, 1], [], []>} : vector<18x16xf32>, vector<16x32xf32>, vector<18x32xf32> -> vector<18x32xf32>
    %164 = arith.addf %155, %163 : vector<18x32xf32>
    %c324 = arith.constant 324 : index
    %c0_96 = arith.constant 0 : index
    %165 = vector.load %arg0[%c324, %c0_96] : memref<450x128xf32, #tpu.memory_space<vmem>>, vector<18x128xf32>
    %cst_97 = arith.constant dense<0.000000e+00> : vector<18x16xf32>
    %166 = tpu.matmul %165, %0, %cst_97 {dimension_numbers = #tpu.dot_dimension_numbers<[1], [0], [0], [1], [0, 0, 1, 1], [], []>} : vector<18x128xf32>, vector<128x16xf32>, vector<18x16xf32> -> vector<18x16xf32>
    %167 = vector.broadcast %1 : vector<1x16xf32> to vector<18x16xf32>
    %168 = arith.addf %166, %167 : vector<18x16xf32>
    %cst_98 = arith.constant 0.000000e+00 : f32
    %169 = vector.broadcast %cst_98 : f32 to vector<18x16xf32>
    %170 = arith.maximumf %168, %169 : vector<18x16xf32>
    %c288_99 = arith.constant 288 : index
    %c0_100 = arith.constant 0 : index
    %171 = vector.load %arg3[%c288_99, %c0_100] : memref<400x32xf32, #tpu.memory_space<vmem>>, vector<16x32xf32>
    %cst_101 = arith.constant dense<0.000000e+00> : vector<18x32xf32>
    %172 = tpu.matmul %170, %171, %cst_101 {dimension_numbers = #tpu.dot_dimension_numbers<[1], [0], [0], [1], [0, 0, 1, 1], [], []>} : vector<18x16xf32>, vector<16x32xf32>, vector<18x32xf32> -> vector<18x32xf32>
    %173 = arith.addf %164, %172 : vector<18x32xf32>
    %c342 = arith.constant 342 : index
    %c0_102 = arith.constant 0 : index
    %174 = vector.load %arg0[%c342, %c0_102] : memref<450x128xf32, #tpu.memory_space<vmem>>, vector<18x128xf32>
    %cst_103 = arith.constant dense<0.000000e+00> : vector<18x16xf32>
    %175 = tpu.matmul %174, %0, %cst_103 {dimension_numbers = #tpu.dot_dimension_numbers<[1], [0], [0], [1], [0, 0, 1, 1], [], []>} : vector<18x128xf32>, vector<128x16xf32>, vector<18x16xf32> -> vector<18x16xf32>
    %176 = vector.broadcast %1 : vector<1x16xf32> to vector<18x16xf32>
    %177 = arith.addf %175, %176 : vector<18x16xf32>
    %cst_104 = arith.constant 0.000000e+00 : f32
    %178 = vector.broadcast %cst_104 : f32 to vector<18x16xf32>
    %179 = arith.maximumf %177, %178 : vector<18x16xf32>
    %c304 = arith.constant 304 : index
    %c0_105 = arith.constant 0 : index
    %180 = vector.load %arg3[%c304, %c0_105] : memref<400x32xf32, #tpu.memory_space<vmem>>, vector<16x32xf32>
    %cst_106 = arith.constant dense<0.000000e+00> : vector<18x32xf32>
    %181 = tpu.matmul %179, %180, %cst_106 {dimension_numbers = #tpu.dot_dimension_numbers<[1], [0], [0], [1], [0, 0, 1, 1], [], []>} : vector<18x16xf32>, vector<16x32xf32>, vector<18x32xf32> -> vector<18x32xf32>
    %182 = arith.addf %173, %181 : vector<18x32xf32>
    %c360 = arith.constant 360 : index
    %c0_107 = arith.constant 0 : index
    %183 = vector.load %arg0[%c360, %c0_107] : memref<450x128xf32, #tpu.memory_space<vmem>>, vector<18x128xf32>
    %cst_108 = arith.constant dense<0.000000e+00> : vector<18x16xf32>
    %184 = tpu.matmul %183, %0, %cst_108 {dimension_numbers = #tpu.dot_dimension_numbers<[1], [0], [0], [1], [0, 0, 1, 1], [], []>} : vector<18x128xf32>, vector<128x16xf32>, vector<18x16xf32> -> vector<18x16xf32>
    %185 = vector.broadcast %1 : vector<1x16xf32> to vector<18x16xf32>
    %186 = arith.addf %184, %185 : vector<18x16xf32>
    %cst_109 = arith.constant 0.000000e+00 : f32
    %187 = vector.broadcast %cst_109 : f32 to vector<18x16xf32>
    %188 = arith.maximumf %186, %187 : vector<18x16xf32>
    %c320 = arith.constant 320 : index
    %c0_110 = arith.constant 0 : index
    %189 = vector.load %arg3[%c320, %c0_110] : memref<400x32xf32, #tpu.memory_space<vmem>>, vector<16x32xf32>
    %cst_111 = arith.constant dense<0.000000e+00> : vector<18x32xf32>
    %190 = tpu.matmul %188, %189, %cst_111 {dimension_numbers = #tpu.dot_dimension_numbers<[1], [0], [0], [1], [0, 0, 1, 1], [], []>} : vector<18x16xf32>, vector<16x32xf32>, vector<18x32xf32> -> vector<18x32xf32>
    %191 = arith.addf %182, %190 : vector<18x32xf32>
    %c378 = arith.constant 378 : index
    %c0_112 = arith.constant 0 : index
    %192 = vector.load %arg0[%c378, %c0_112] : memref<450x128xf32, #tpu.memory_space<vmem>>, vector<18x128xf32>
    %cst_113 = arith.constant dense<0.000000e+00> : vector<18x16xf32>
    %193 = tpu.matmul %192, %0, %cst_113 {dimension_numbers = #tpu.dot_dimension_numbers<[1], [0], [0], [1], [0, 0, 1, 1], [], []>} : vector<18x128xf32>, vector<128x16xf32>, vector<18x16xf32> -> vector<18x16xf32>
    %194 = vector.broadcast %1 : vector<1x16xf32> to vector<18x16xf32>
    %195 = arith.addf %193, %194 : vector<18x16xf32>
    %cst_114 = arith.constant 0.000000e+00 : f32
    %196 = vector.broadcast %cst_114 : f32 to vector<18x16xf32>
    %197 = arith.maximumf %195, %196 : vector<18x16xf32>
    %c336 = arith.constant 336 : index
    %c0_115 = arith.constant 0 : index
    %198 = vector.load %arg3[%c336, %c0_115] : memref<400x32xf32, #tpu.memory_space<vmem>>, vector<16x32xf32>
    %cst_116 = arith.constant dense<0.000000e+00> : vector<18x32xf32>
    %199 = tpu.matmul %197, %198, %cst_116 {dimension_numbers = #tpu.dot_dimension_numbers<[1], [0], [0], [1], [0, 0, 1, 1], [], []>} : vector<18x16xf32>, vector<16x32xf32>, vector<18x32xf32> -> vector<18x32xf32>
    %200 = arith.addf %191, %199 : vector<18x32xf32>
    %c396 = arith.constant 396 : index
    %c0_117 = arith.constant 0 : index
    %201 = vector.load %arg0[%c396, %c0_117] : memref<450x128xf32, #tpu.memory_space<vmem>>, vector<18x128xf32>
    %cst_118 = arith.constant dense<0.000000e+00> : vector<18x16xf32>
    %202 = tpu.matmul %201, %0, %cst_118 {dimension_numbers = #tpu.dot_dimension_numbers<[1], [0], [0], [1], [0, 0, 1, 1], [], []>} : vector<18x128xf32>, vector<128x16xf32>, vector<18x16xf32> -> vector<18x16xf32>
    %203 = vector.broadcast %1 : vector<1x16xf32> to vector<18x16xf32>
    %204 = arith.addf %202, %203 : vector<18x16xf32>
    %cst_119 = arith.constant 0.000000e+00 : f32
    %205 = vector.broadcast %cst_119 : f32 to vector<18x16xf32>
    %206 = arith.maximumf %204, %205 : vector<18x16xf32>
    %c352 = arith.constant 352 : index
    %c0_120 = arith.constant 0 : index
    %207 = vector.load %arg3[%c352, %c0_120] : memref<400x32xf32, #tpu.memory_space<vmem>>, vector<16x32xf32>
    %cst_121 = arith.constant dense<0.000000e+00> : vector<18x32xf32>
    %208 = tpu.matmul %206, %207, %cst_121 {dimension_numbers = #tpu.dot_dimension_numbers<[1], [0], [0], [1], [0, 0, 1, 1], [], []>} : vector<18x16xf32>, vector<16x32xf32>, vector<18x32xf32> -> vector<18x32xf32>
    %209 = arith.addf %200, %208 : vector<18x32xf32>
    %c414 = arith.constant 414 : index
    %c0_122 = arith.constant 0 : index
    %210 = vector.load %arg0[%c414, %c0_122] : memref<450x128xf32, #tpu.memory_space<vmem>>, vector<18x128xf32>
    %cst_123 = arith.constant dense<0.000000e+00> : vector<18x16xf32>
    %211 = tpu.matmul %210, %0, %cst_123 {dimension_numbers = #tpu.dot_dimension_numbers<[1], [0], [0], [1], [0, 0, 1, 1], [], []>} : vector<18x128xf32>, vector<128x16xf32>, vector<18x16xf32> -> vector<18x16xf32>
    %212 = vector.broadcast %1 : vector<1x16xf32> to vector<18x16xf32>
    %213 = arith.addf %211, %212 : vector<18x16xf32>
    %cst_124 = arith.constant 0.000000e+00 : f32
    %214 = vector.broadcast %cst_124 : f32 to vector<18x16xf32>
    %215 = arith.maximumf %213, %214 : vector<18x16xf32>
    %c368 = arith.constant 368 : index
    %c0_125 = arith.constant 0 : index
    %216 = vector.load %arg3[%c368, %c0_125] : memref<400x32xf32, #tpu.memory_space<vmem>>, vector<16x32xf32>
    %cst_126 = arith.constant dense<0.000000e+00> : vector<18x32xf32>
    %217 = tpu.matmul %215, %216, %cst_126 {dimension_numbers = #tpu.dot_dimension_numbers<[1], [0], [0], [1], [0, 0, 1, 1], [], []>} : vector<18x16xf32>, vector<16x32xf32>, vector<18x32xf32> -> vector<18x32xf32>
    %218 = arith.addf %209, %217 : vector<18x32xf32>
    %c432 = arith.constant 432 : index
    %c0_127 = arith.constant 0 : index
    %219 = vector.load %arg0[%c432, %c0_127] : memref<450x128xf32, #tpu.memory_space<vmem>>, vector<18x128xf32>
    %cst_128 = arith.constant dense<0.000000e+00> : vector<18x16xf32>
    %220 = tpu.matmul %219, %0, %cst_128 {dimension_numbers = #tpu.dot_dimension_numbers<[1], [0], [0], [1], [0, 0, 1, 1], [], []>} : vector<18x128xf32>, vector<128x16xf32>, vector<18x16xf32> -> vector<18x16xf32>
    %221 = vector.broadcast %1 : vector<1x16xf32> to vector<18x16xf32>
    %222 = arith.addf %220, %221 : vector<18x16xf32>
    %cst_129 = arith.constant 0.000000e+00 : f32
    %223 = vector.broadcast %cst_129 : f32 to vector<18x16xf32>
    %224 = arith.maximumf %222, %223 : vector<18x16xf32>
    %c384 = arith.constant 384 : index
    %c0_130 = arith.constant 0 : index
    %225 = vector.load %arg3[%c384, %c0_130] : memref<400x32xf32, #tpu.memory_space<vmem>>, vector<16x32xf32>
    %cst_131 = arith.constant dense<0.000000e+00> : vector<18x32xf32>
    %226 = tpu.matmul %224, %225, %cst_131 {dimension_numbers = #tpu.dot_dimension_numbers<[1], [0], [0], [1], [0, 0, 1, 1], [], []>} : vector<18x16xf32>, vector<16x32xf32>, vector<18x32xf32> -> vector<18x32xf32>
    %227 = arith.addf %218, %226 : vector<18x32xf32>
    %c0_132 = arith.constant 0 : index
    %c0_133 = arith.constant 0 : index
    %228 = vector.load %arg4[%c0_132, %c0_133] : memref<1x32xf32, #tpu.memory_space<vmem>>, vector<1x32xf32>
    %229 = vector.broadcast %228 : vector<1x32xf32> to vector<18x32xf32>
    %230 = arith.addf %227, %229 : vector<18x32xf32>
    %cst_134 = arith.constant 0.000000e+00 : f32
    %231 = vector.broadcast %cst_134 : f32 to vector<18x32xf32>
    %232 = arith.maximumf %230, %231 : vector<18x32xf32>
    %c0_135 = arith.constant 0 : index
    %c0_136 = arith.constant 0 : index
    %233 = vector.load %arg10[%c0_135, %c0_136] : memref<18x32xf32, #tpu.memory_space<vmem>>, vector<18x32xf32>
    tpu.vector_store %arg10[%c0_135, %c0_136], %232 {strides = array<i32>} : memref<18x32xf32, #tpu.memory_space<vmem>>, vector<18x32xf32>,
    %cst_137 = arith.constant 0.000000e+00 : f32
    %234 = vector.broadcast %cst_137 : f32 to vector<2x32xf32>
    %cst_138 = arith.constant 0.000000e+00 : f32
    %235 = vector.broadcast %cst_138 : f32 to vector<2x64xf32>
    %c0_139 = arith.constant 0 : index
    %c0_140 = arith.constant 0 : index
    %236 = vector.load %arg10[%c0_139, %c0_140] : memref<18x32xf32, #tpu.memory_space<vmem>>, vector<2x32xf32>
    %c0_141 = arith.constant 0 : index
    %c0_142 = arith.constant 0 : index
    %237 = vector.load %arg5[%c0_141, %c0_142] : memref<288x64xf32, #tpu.memory_space<vmem>>, vector<32x64xf32>
    %cst_143 = arith.constant dense<0.000000e+00> : vector<2x64xf32>
    %238 = tpu.matmul %236, %237, %cst_143 {dimension_numbers = #tpu.dot_dimension_numbers<[1], [0], [0], [1], [0, 0, 1, 1], [], []>} : vector<2x32xf32>, vector<32x64xf32>, vector<2x64xf32> -> vector<2x64xf32>
    %239 = arith.addf %235, %238 : vector<2x64xf32>
    %c2 = arith.constant 2 : index
    %c0_144 = arith.constant 0 : index
    %240 = vector.load %arg10[%c2, %c0_144] : memref<18x32xf32, #tpu.memory_space<vmem>>, vector<2x32xf32>
    %c32_145 = arith.constant 32 : index
    %c0_146 = arith.constant 0 : index
    %241 = vector.load %arg5[%c32_145, %c0_146] : memref<288x64xf32, #tpu.memory_space<vmem>>, vector<32x64xf32>
    %cst_147 = arith.constant dense<0.000000e+00> : vector<2x64xf32>
    %242 = tpu.matmul %240, %241, %cst_147 {dimension_numbers = #tpu.dot_dimension_numbers<[1], [0], [0], [1], [0, 0, 1, 1], [], []>} : vector<2x32xf32>, vector<32x64xf32>, vector<2x64xf32> -> vector<2x64xf32>
    %243 = arith.addf %239, %242 : vector<2x64xf32>
    %c4 = arith.constant 4 : index
    %c0_148 = arith.constant 0 : index
    %244 = vector.load %arg10[%c4, %c0_148] : memref<18x32xf32, #tpu.memory_space<vmem>>, vector<2x32xf32>
    %c64_149 = arith.constant 64 : index
    %c0_150 = arith.constant 0 : index
    %245 = vector.load %arg5[%c64_149, %c0_150] : memref<288x64xf32, #tpu.memory_space<vmem>>, vector<32x64xf32>
    %cst_151 = arith.constant dense<0.000000e+00> : vector<2x64xf32>
    %246 = tpu.matmul %244, %245, %cst_151 {dimension_numbers = #tpu.dot_dimension_numbers<[1], [0], [0], [1], [0, 0, 1, 1], [], []>} : vector<2x32xf32>, vector<32x64xf32>, vector<2x64xf32> -> vector<2x64xf32>
    %247 = arith.addf %243, %246 : vector<2x64xf32>
    %c6 = arith.constant 6 : index
    %c0_152 = arith.constant 0 : index
    %248 = vector.load %arg10[%c6, %c0_152] : memref<18x32xf32, #tpu.memory_space<vmem>>, vector<2x32xf32>
    %c96_153 = arith.constant 96 : index
    %c0_154 = arith.constant 0 : index
    %249 = vector.load %arg5[%c96_153, %c0_154] : memref<288x64xf32, #tpu.memory_space<vmem>>, vector<32x64xf32>
    %cst_155 = arith.constant dense<0.000000e+00> : vector<2x64xf32>
    %250 = tpu.matmul %248, %249, %cst_155 {dimension_numbers = #tpu.dot_dimension_numbers<[1], [0], [0], [1], [0, 0, 1, 1], [], []>} : vector<2x32xf32>, vector<32x64xf32>, vector<2x64xf32> -> vector<2x64xf32>
    %251 = arith.addf %247, %250 : vector<2x64xf32>
    %c8 = arith.constant 8 : index
    %c0_156 = arith.constant 0 : index
    %252 = vector.load %arg10[%c8, %c0_156] : memref<18x32xf32, #tpu.memory_space<vmem>>, vector<2x32xf32>
    %c128_157 = arith.constant 128 : index
    %c0_158 = arith.constant 0 : index
    %253 = vector.load %arg5[%c128_157, %c0_158] : memref<288x64xf32, #tpu.memory_space<vmem>>, vector<32x64xf32>
    %cst_159 = arith.constant dense<0.000000e+00> : vector<2x64xf32>
    %254 = tpu.matmul %252, %253, %cst_159 {dimension_numbers = #tpu.dot_dimension_numbers<[1], [0], [0], [1], [0, 0, 1, 1], [], []>} : vector<2x32xf32>, vector<32x64xf32>, vector<2x64xf32> -> vector<2x64xf32>
    %255 = arith.addf %251, %254 : vector<2x64xf32>
    %c10 = arith.constant 10 : index
    %c0_160 = arith.constant 0 : index
    %256 = vector.load %arg10[%c10, %c0_160] : memref<18x32xf32, #tpu.memory_space<vmem>>, vector<2x32xf32>
    %c160_161 = arith.constant 160 : index
    %c0_162 = arith.constant 0 : index
    %257 = vector.load %arg5[%c160_161, %c0_162] : memref<288x64xf32, #tpu.memory_space<vmem>>, vector<32x64xf32>
    %cst_163 = arith.constant dense<0.000000e+00> : vector<2x64xf32>
    %258 = tpu.matmul %256, %257, %cst_163 {dimension_numbers = #tpu.dot_dimension_numbers<[1], [0], [0], [1], [0, 0, 1, 1], [], []>} : vector<2x32xf32>, vector<32x64xf32>, vector<2x64xf32> -> vector<2x64xf32>
    %259 = arith.addf %255, %258 : vector<2x64xf32>
    %c12 = arith.constant 12 : index
    %c0_164 = arith.constant 0 : index
    %260 = vector.load %arg10[%c12, %c0_164] : memref<18x32xf32, #tpu.memory_space<vmem>>, vector<2x32xf32>
    %c192_165 = arith.constant 192 : index
    %c0_166 = arith.constant 0 : index
    %261 = vector.load %arg5[%c192_165, %c0_166] : memref<288x64xf32, #tpu.memory_space<vmem>>, vector<32x64xf32>
    %cst_167 = arith.constant dense<0.000000e+00> : vector<2x64xf32>
    %262 = tpu.matmul %260, %261, %cst_167 {dimension_numbers = #tpu.dot_dimension_numbers<[1], [0], [0], [1], [0, 0, 1, 1], [], []>} : vector<2x32xf32>, vector<32x64xf32>, vector<2x64xf32> -> vector<2x64xf32>
    %263 = arith.addf %259, %262 : vector<2x64xf32>
    %c14 = arith.constant 14 : index
    %c0_168 = arith.constant 0 : index
    %264 = vector.load %arg10[%c14, %c0_168] : memref<18x32xf32, #tpu.memory_space<vmem>>, vector<2x32xf32>
    %c224_169 = arith.constant 224 : index
    %c0_170 = arith.constant 0 : index
    %265 = vector.load %arg5[%c224_169, %c0_170] : memref<288x64xf32, #tpu.memory_space<vmem>>, vector<32x64xf32>
    %cst_171 = arith.constant dense<0.000000e+00> : vector<2x64xf32>
    %266 = tpu.matmul %264, %265, %cst_171 {dimension_numbers = #tpu.dot_dimension_numbers<[1], [0], [0], [1], [0, 0, 1, 1], [], []>} : vector<2x32xf32>, vector<32x64xf32>, vector<2x64xf32> -> vector<2x64xf32>
    %267 = arith.addf %263, %266 : vector<2x64xf32>
    %c16_172 = arith.constant 16 : index
    %c0_173 = arith.constant 0 : index
    %268 = vector.load %arg10[%c16_172, %c0_173] : memref<18x32xf32, #tpu.memory_space<vmem>>, vector<2x32xf32>
    %c256_174 = arith.constant 256 : index
    %c0_175 = arith.constant 0 : index
    %269 = vector.load %arg5[%c256_174, %c0_175] : memref<288x64xf32, #tpu.memory_space<vmem>>, vector<32x64xf32>
    %cst_176 = arith.constant dense<0.000000e+00> : vector<2x64xf32>
    %270 = tpu.matmul %268, %269, %cst_176 {dimension_numbers = #tpu.dot_dimension_numbers<[1], [0], [0], [1], [0, 0, 1, 1], [], []>} : vector<2x32xf32>, vector<32x64xf32>, vector<2x64xf32> -> vector<2x64xf32>
    %271 = arith.addf %267, %270 : vector<2x64xf32>
    %c0_177 = arith.constant 0 : index
    %c0_178 = arith.constant 0 : index
    %272 = vector.load %arg6[%c0_177, %c0_178] : memref<1x64xf32, #tpu.memory_space<vmem>>, vector<1x64xf32>
    %273 = vector.broadcast %272 : vector<1x64xf32> to vector<2x64xf32>
    %274 = arith.addf %271, %273 : vector<2x64xf32>
    %cst_179 = arith.constant 0.000000e+00 : f32
    %275 = vector.broadcast %cst_179 : f32 to vector<2x64xf32>
    %276 = arith.maximumf %274, %275 : vector<2x64xf32>
    %c0_180 = arith.constant 0 : index
    %c0_181 = arith.constant 0 : index
    %277 = vector.load %arg7[%c0_180, %c0_181] : memref<64x32xf32, #tpu.memory_space<vmem>>, vector<64x32xf32>
    %cst_182 = arith.constant dense<0.000000e+00> : vector<2x32xf32>
    %278 = tpu.matmul %276, %277, %cst_182 {dimension_numbers = #tpu.dot_dimension_numbers<[1], [0], [0], [1], [0, 0, 1, 1], [], []>} : vector<2x64xf32>, vector<64x32xf32>, vector<2x32xf32> -> vector<2x32xf32>
    %279 = arith.addf %234, %278 : vector<2x32xf32>
    %c0_183 = arith.constant 0 : index
    %c0_184 = arith.constant 0 : index
    %280 = vector.load %arg8[%c0_183, %c0_184] : memref<1x32xf32, #tpu.memory_space<vmem>>, vector<1x32xf32>
    %281 = vector.broadcast %280 : vector<1x32xf32> to vector<2x32xf32>
    %282 = arith.addf %279, %281 : vector<2x32xf32>
    %c0_185 = arith.constant 0 : index
    %c0_186 = arith.constant 0 : index
    %283 = vector.load %arg9[%c0_185, %c0_186] : memref<2x32xf32, #tpu.memory_space<vmem>>, vector<2x32xf32>
    tpu.vector_store %arg9[%c0_185, %c0_186], %282 {strides = array<i32>} : memref<2x32xf32, #tpu.memory_space<vmem>>, vector<2x32xf32>,
    return
  }
}

</mosaic_0001>

<llo_original>
// kernel: cnn_feature_extractor_forward.1
$region0: #{cnn_feature_extractor_forward.1}
  #allocation0 [shape = 'u32[]', space=smem, size = 0x4, offset = 0x4, fixed_abs, tag = 'smem constant byte address 0x4 - core index']
  #allocation1 [shape = 'u32[72,128]{1,0:T(1,128)}', space=vmem, size = 0x9000, scoped, tag = 'internal scratch']
  #allocation2 [shape = 'f32[18,32]{1,0:T(8,128)}', space=vmem, size = 0x3000, scoped, tag = 'scratch operand']
  %s0 = inlined_call_operand.vmem [shape: f32[450,128], index: 0, kind: input, shape index: {}]
  %s1 = inlined_call_operand.vmem [shape: f32[128,16], index: 1, kind: input, shape index: {}]
  %s2 = inlined_call_operand.vmem [shape: f32[1,16], index: 2, kind: input, shape index: {}]
  %s3 = inlined_call_operand.vmem [shape: f32[400,32], index: 3, kind: input, shape index: {}]
  %s4 = inlined_call_operand.vmem [shape: f32[1,32], index: 4, kind: input, shape index: {}]
  %s5 = inlined_call_operand.vmem [shape: f32[288,64], index: 5, kind: input, shape index: {}]
  %s6 = inlined_call_operand.vmem [shape: f32[1,64], index: 6, kind: input, shape index: {}]
  %s7 = inlined_call_operand.vmem [shape: f32[64,32], index: 7, kind: input, shape index: {}]
  %s8 = inlined_call_operand.vmem [shape: f32[1,32], index: 8, kind: input, shape index: {}]
  %s9 = inlined_call_operand.hbm [shape: f32[2,32], index: 9, kind: output, shape index: {}]
  %s10 = sld [smem:[#allocation0]]
  $region46: #{cnn_feature_extractor_forward.1} parent=0
    _
  %s12 = ssub.s32 1, %s10
  %s13 = scalar_select 0, %s12, %s10
  $region1: #{cnn_feature_extractor_forward.1} parent=0
    #allocation3 [shape = 'u8[1024]{0}', space=vmem, size = 0x400, scoped, tag = 'output window, operand 0, single buffered']
    #allocation4 [shape = 's32[1]{0}', space=sflag, size = 0x4, scoped, tag = 'scoped memory for cnn_feature_extractor_forward.1']
    %14 = vsyncpa [#allocation4], 0
    // Predicated region
    $region2: #{cnn_feature_extractor_forward.1} parent=1 // pred_check
      _
    $region3: #{cnn_feature_extractor_forward.1} parent=1 // pred_check_branch
      %16 = sbr.rel (0) target = $region5
    $region4: #{cnn_feature_extractor_forward.1} parent=1 // pred_region
      _
    $region5: #{cnn_feature_extractor_forward.1} parent=1 // pred_fallthru
      _
    // Predicated region
    $region6: #{cnn_feature_extractor_forward.1} parent=1 // pred_check
      _
    $region7: #{cnn_feature_extractor_forward.1} parent=1 // pred_check_branch
      %18 = sbr.rel (0) target = $region9
    $region8: #{cnn_feature_extractor_forward.1} parent=1 // pred_region
      _
    $region9: #{cnn_feature_extractor_forward.1} parent=1 // pred_fallthru
      _
    // Predicated region
    $region10: #{cnn_feature_extractor_forward.1} parent=1 // pred_check
      _
    $region11: #{cnn_feature_extractor_forward.1} parent=1 // pred_check_branch
      %20 = sbr.rel (0) target = $region13
    $region12: #{cnn_feature_extractor_forward.1} parent=1 // pred_region
      _
    $region13: #{cnn_feature_extractor_forward.1} parent=1 // pred_fallthru
      _
    // Predicated region
    $region14: #{cnn_feature_extractor_forward.1} parent=1 // pred_check
      _
    $region15: #{cnn_feature_extractor_forward.1} parent=1 // pred_check_branch
      %22 = sbr.rel (0) target = $region17
    $region16: #{cnn_feature_extractor_forward.1} parent=1 // pred_region
      _
    $region17: #{cnn_feature_extractor_forward.1} parent=1 // pred_fallthru
      _
    // Predicated region
    $region18: #{cnn_feature_extractor_forward.1} parent=1 // pred_check
      _
    $region19: #{cnn_feature_extractor_forward.1} parent=1 // pred_check_branch
      %24 = sbr.rel (0) target = $region21
    $region20: #{cnn_feature_extractor_forward.1} parent=1 // pred_region
      _
    $region21: #{cnn_feature_extractor_forward.1} parent=1 // pred_fallthru
      _
    // Predicated region
    $region22: #{cnn_feature_extractor_forward.1} parent=1 // pred_check
      _
    $region23: #{cnn_feature_extractor_forward.1} parent=1 // pred_check_branch
      %26 = sbr.rel (0) target = $region25
    $region24: #{cnn_feature_extractor_forward.1} parent=1 // pred_region
      _
    $region25: #{cnn_feature_extractor_forward.1} parent=1 // pred_fallthru
      _
    // Predicated region
    $region26: #{cnn_feature_extractor_forward.1} parent=1 // pred_check
      _
    $region27: #{cnn_feature_extractor_forward.1} parent=1 // pred_check_branch
      %28 = sbr.rel (0) target = $region29
    $region28: #{cnn_feature_extractor_forward.1} parent=1 // pred_region
      _
    $region29: #{cnn_feature_extractor_forward.1} parent=1 // pred_fallthru
      _
    // Predicated region
    $region30: #{cnn_feature_extractor_forward.1} parent=1 // pred_check
      _
    $region31: #{cnn_feature_extractor_forward.1} parent=1 // pred_check_branch
      %30 = sbr.rel (0) target = $region33
    $region32: #{cnn_feature_extractor_forward.1} parent=1 // pred_region
      _
    $region33: #{cnn_feature_extractor_forward.1} parent=1 // pred_fallthru
      _
    // Predicated region
    $region34: #{cnn_feature_extractor_forward.1} parent=1 // pred_check
      _
    $region35: #{cnn_feature_extractor_forward.1} parent=1 // pred_check_branch
      %32 = sbr.rel (0) target = $region37
    $region36: #{cnn_feature_extractor_forward.1} parent=1 // pred_region
      _
    $region37: #{cnn_feature_extractor_forward.1} parent=1 // pred_fallthru
      _
    %v33 = vld [vmem:[%s1] sm:$0xff]
    %v34 = vld [vmem:[%s1 + $0x8] sm:$0xff]
    %v35 = vld [vmem:[%s1 + $0x10] sm:$0xff]
    %v36 = vld [vmem:[%s1 + $0x18] sm:$0xff]
    %v37 = vld [vmem:[%s1 + $0x20] sm:$0xff]
    %v38 = vld [vmem:[%s1 + $0x28] sm:$0xff]
    %v39 = vld [vmem:[%s1 + $0x30] sm:$0xff]
    %v40 = vld [vmem:[%s1 + $0x38] sm:$0xff]
    %v41 = vld [vmem:[%s1 + $0x40] sm:$0xff]
    %v42 = vld [vmem:[%s1 + $0x48] sm:$0xff]
    %v43 = vld [vmem:[%s1 + $0x50] sm:$0xff]
    %v44 = vld [vmem:[%s1 + $0x58] sm:$0xff]
    %v45 = vld [vmem:[%s1 + $0x60] sm:$0xff]
    %v46 = vld [vmem:[%s1 + $0x68] sm:$0xff]
    %v47 = vld [vmem:[%s1 + $0x70] sm:$0xff]
    %v48 = vld [vmem:[%s1 + $0x78] sm:$0xff]
    %v49 = vld [vmem:[%s2] sm:$0x1]
    %v50 = vld [vmem:[%s0] sm:$0xff]
    %v51 = vld [vmem:[%s0 + $0x8] sm:$0xff]
    %v52 = vld [vmem:[%s0 + $0x10] sm:$0x3]
    %v54 = vperm.slane %v49, 0
    %56 = vmatpush.msra.mxu0 %v48
    %57 = vmatpush.msra.mxu0 %v47
    %58 = vmatpush.msra.mxu0 %v46
    %59 = vmatpush.msra.mxu0 %v45
    %60 = vmatpush.msra.mxu0 %v44
    %61 = vmatpush.msra.mxu0 %v43
    %62 = vmatpush.msra.mxu0 %v42
    %63 = vmatpush.msra.mxu0 %v41
    %64 = vmatpush.msra.mxu0 %v40
    %65 = vmatpush.msra.mxu0 %v39
    %66 = vmatpush.msra.mxu0 %v38
    %67 = vmatpush.msra.mxu0 %v37
    %68 = vmatpush.msra.mxu0 %v36
    %69 = vmatpush.msra.mxu0 %v35
    %70 = vmatpush.msra.mxu0 %v34
    %71 = vmatpush.msra.mxu0 %v33
    %72 = vmatmul.f32.gmra.mxu0 %v50
    %v73 = vpop.f32.mrf.mxu0
    %v74 = vadd.f32 %v54, %v73
    %75 = vmatmul.f32.gmra.mxu0 %v51
    %v76 = vpop.f32.mrf.mxu0
    %v77 = vadd.f32 %v54, %v76
    %78 = vmatmul.f32.gmra.mxu0 %v52
    %v79 = vpop.f32.mrf.mxu0
    %v80 = vadd.f32 %v54, %v79
    %81 = vdwg.mxu0
    %v82 = vmax.f32 %v74, 0.0
    %v83 = vmax.f32 %v77, 0.0
    %v84 = vmax.f32 %v80, 0.0
    %v85 = vld [vmem:[%s3] sm:$0xff]
    %v86 = vld [vmem:[%s3 + $0x8] sm:$0xff]
    %v87 = vld [vmem:[%s0 + $0x12] sm:$0xff]
    %v88 = vld [vmem:[%s0 + $0x1a] sm:$0xff]
    %v89 = vld [vmem:[%s0 + $0x22] sm:$0x3]
    %90 = vmatpush.msra.mxu0 %v48
    %91 = vmatpush.msra.mxu0 %v47
    %92 = vmatpush.msra.mxu0 %v46
    %93 = vmatpush.msra.mxu0 %v45
    %94 = vmatpush.msra.mxu0 %v44
    %95 = vmatpush.msra.mxu0 %v43
    %96 = vmatpush.msra.mxu0 %v42
    %97 = vmatpush.msra.mxu0 %v41
    %98 = vmatpush.msra.mxu0 %v40
    %99 = vmatpush.msra.mxu0 %v39
    %100 = vmatpush.msra.mxu0 %v38
    %101 = vmatpush.msra.mxu0 %v37
    %102 = vmatpush.msra.mxu0 %v36
    %103 = vmatpush.msra.mxu0 %v35
    %104 = vmatpush.msra.mxu0 %v34
    %105 = vmatpush.msra.mxu0 %v33
    %106 = vmatmul.f32.gmra.mxu0 %v87
    %v107 = vpop.f32.mrf.mxu0
    %v108 = vadd.f32 %v54, %v107
    %109 = vmatmul.f32.gmra.mxu0 %v88
    %v110 = vpop.f32.mrf.mxu0
    %v111 = vadd.f32 %v54, %v110
    %112 = vmatmul.f32.gmra.mxu0 %v89
    %v113 = vpop.f32.mrf.mxu0
    %v114 = vadd.f32 %v54, %v113
    %115 = vdwg.mxu0
    %v116 = vmax.f32 %v108, 0.0
    %v117 = vmax.f32 %v111, 0.0
    %v118 = vmax.f32 %v114, 0.0
    %v119 = vld [vmem:[%s3 + $0x10] sm:$0xff]
    %v120 = vld [vmem:[%s3 + $0x18] sm:$0xff]
    %vm121 = vcmask 130048
    %v123 = vsel %vm121, %v116, 0
    %v126 = vsel %vm121, %v117, 0
    %v129 = vsel %vm121, %v118, 0
    %131 = vmatpush.msra.mxu0 0.0
    %132 = vmatpush.msra.mxu0 0.0
    %133 = vmatpush.msra.mxu0 0.0
    %134 = vmatpush.msra.mxu0 0.0
    %135 = vmatpush.msra.mxu0 0.0
    %136 = vmatpush.msra.mxu0 0.0
    %137 = vmatpush.msra.mxu0 0.0
    %138 = vmatpush.msra.mxu0 0.0
    %139 = vmatpush.msra.mxu0 0.0
    %140 = vmatpush.msra.mxu0 0.0
    %141 = vmatpush.msra.mxu0 0.0
    %142 = vmatpush.msra.mxu0 0.0
    %143 = vmatpush.msra.mxu0 0.0
    %144 = vmatpush.msra.mxu0 0.0
    %145 = vmatpush.msra.mxu0 %v120
    %146 = vmatpush.msra.mxu0 %v119
    %147 = vmatmul.f32.gmra.mxu0 %v123
    %v148 = vpop.f32.mrf.mxu0
    %v149 = vadd.f32 0.0, %v148
    %150 = vmatmul.f32.gmra.mxu0 %v126
    %v151 = vpop.f32.mrf.mxu0
    %v152 = vadd.f32 0.0, %v151
    %153 = vmatmul.f32.gmra.mxu0 %v129
    %v154 = vpop.f32.mrf.mxu0
    %v155 = vadd.f32 0.0, %v154
    %156 = vdwg.mxu0
    %v158 = vsel %vm121, %v82, 0
    %v161 = vsel %vm121, %v83, 0
    %v164 = vsel %vm121, %v84, 0
    %166 = vmatpush.msra.mxu0 0.0
    %167 = vmatpush.msra.mxu0 0.0
    %168 = vmatpush.msra.mxu0 0.0
    %169 = vmatpush.msra.mxu0 0.0
    %170 = vmatpush.msra.mxu0 0.0
    %171 = vmatpush.msra.mxu0 0.0
    %172 = vmatpush.msra.mxu0 0.0
    %173 = vmatpush.msra.mxu0 0.0
    %174 = vmatpush.msra.mxu0 0.0
    %175 = vmatpush.msra.mxu0 0.0
    %176 = vmatpush.msra.mxu0 0.0
    %177 = vmatpush.msra.mxu0 0.0
    %178 = vmatpush.msra.mxu0 0.0
    %179 = vmatpush.msra.mxu0 0.0
    %180 = vmatpush.msra.mxu0 %v86
    %181 = vmatpush.msra.mxu0 %v85
    %182 = vmatmul.f32.gmra.mxu0 %v158
    %v183 = vpop.f32.mrf.mxu0
    %v184 = vadd.f32 %v149, %v183
    %185 = vmatmul.f32.gmra.mxu0 %v161
    %v186 = vpop.f32.mrf.mxu0
    %v187 = vadd.f32 %v152, %v186
    %188 = vmatmul.f32.gmra.mxu0 %v164
    %v189 = vpop.f32.mrf.mxu0
    %v190 = vadd.f32 %v155, %v189
    %191 = vdwg.mxu0
    %v192 = vld [vmem:[%s0 + $0x24] sm:$0xff]
    %v193 = vld [vmem:[%s0 + $0x2c] sm:$0xff]
    %v194 = vld [vmem:[%s0 + $0x34] sm:$0x3]
    %195 = vmatpush.msra.mxu0 %v48
    %196 = vmatpush.msra.mxu0 %v47
    %197 = vmatpush.msra.mxu0 %v46
    %198 = vmatpush.msra.mxu0 %v45
    %199 = vmatpush.msra.mxu0 %v44
    %200 = vmatpush.msra.mxu0 %v43
    %201 = vmatpush.msra.mxu0 %v42
    %202 = vmatpush.msra.mxu0 %v41
    %203 = vmatpush.msra.mxu0 %v40
    %204 = vmatpush.msra.mxu0 %v39
    %205 = vmatpush.msra.mxu0 %v38
    %206 = vmatpush.msra.mxu0 %v37
    %207 = vmatpush.msra.mxu0 %v36
    %208 = vmatpush.msra.mxu0 %v35
    %209 = vmatpush.msra.mxu0 %v34
    %210 = vmatpush.msra.mxu0 %v33
    %211 = vmatmul.f32.gmra.mxu0 %v192
    %v212 = vpop.f32.mrf.mxu0
    %v213 = vadd.f32 %v54, %v212
    %214 = vmatmul.f32.gmra.mxu0 %v193
    %v215 = vpop.f32.mrf.mxu0
    %v216 = vadd.f32 %v54, %v215
    %217 = vmatmul.f32.gmra.mxu0 %v194
    %v218 = vpop.f32.mrf.mxu0
    %v219 = vadd.f32 %v54, %v218
    %220 = vdwg.mxu0
    %v221 = vmax.f32 %v213, 0.0
    %v222 = vmax.f32 %v216, 0.0
    %v223 = vmax.f32 %v219, 0.0
    %v224 = vld [vmem:[%s3 + $0x20] sm:$0xff]
    %v225 = vld [vmem:[%s3 + $0x28] sm:$0xff]
    %v227 = vsel %vm121, %v221, 0
    %v230 = vsel %vm121, %v222, 0
    %v233 = vsel %vm121, %v223, 0
    %235 = vmatpush.msra.mxu0 0.0
    %236 = vmatpush.msra.mxu0 0.0
    %237 = vmatpush.msra.mxu0 0.0
    %238 = vmatpush.msra.mxu0 0.0
    %239 = vmatpush.msra.mxu0 0.0
    %240 = vmatpush.msra.mxu0 0.0
    %241 = vmatpush.msra.mxu0 0.0
    %242 = vmatpush.msra.mxu0 0.0
    %243 = vmatpush.msra.mxu0 0.0
    %244 = vmatpush.msra.mxu0 0.0
    %245 = vmatpush.msra.mxu0 0.0
    %246 = vmatpush.msra.mxu0 0.0
    %247 = vmatpush.msra.mxu0 0.0
    %248 = vmatpush.msra.mxu0 0.0
    %249 = vmatpush.msra.mxu0 %v225
    %250 = vmatpush.msra.mxu0 %v224
    %251 = vmatmul.f32.gmra.mxu0 %v227
    %v252 = vpop.f32.mrf.mxu0
    %v253 = vadd.f32 0.0, %v252
    %254 = vmatmul.f32.gmra.mxu0 %v230
    %v255 = vpop.f32.mrf.mxu0
    %v256 = vadd.f32 0.0, %v255
    %257 = vmatmul.f32.gmra.mxu0 %v233
    %v258 = vpop.f32.mrf.mxu0
    %v259 = vadd.f32 0.0, %v258
    %260 = vdwg.mxu0
    %v261 = vadd.f32 %v184, %v253
    %v262 = vadd.f32 %v187, %v256
    %v263 = vadd.f32 %v190, %v259
    %v264 = vld [vmem:[%s0 + $0x36] sm:$0xff]
    %v265 = vld [vmem:[%s0 + $0x3e] sm:$0xff]
    %v266 = vld [vmem:[%s0 + $0x46] sm:$0x3]
    %267 = vmatpush.msra.mxu0 %v48
    %268 = vmatpush.msra.mxu0 %v47
    %269 = vmatpush.msra.mxu0 %v46
    %270 = vmatpush.msra.mxu0 %v45
    %271 = vmatpush.msra.mxu0 %v44
    %272 = vmatpush.msra.mxu0 %v43
    %273 = vmatpush.msra.mxu0 %v42
    %274 = vmatpush.msra.mxu0 %v41
    %275 = vmatpush.msra.mxu0 %v40
    %276 = vmatpush.msra.mxu0 %v39
    %277 = vmatpush.msra.mxu0 %v38
    %278 = vmatpush.msra.mxu0 %v37
    %279 = vmatpush.msra.mxu0 %v36
    %280 = vmatpush.msra.mxu0 %v35
    %281 = vmatpush.msra.mxu0 %v34
    %282 = vmatpush.msra.mxu0 %v33
    %283 = vmatmul.f32.gmra.mxu0 %v264
    %v284 = vpop.f32.mrf.mxu0
    %v285 = vadd.f32 %v54, %v284
    %286 = vmatmul.f32.gmra.mxu0 %v265
    %v287 = vpop.f32.mrf.mxu0
    %v288 = vadd.f32 %v54, %v287
    %289 = vmatmul.f32.gmra.mxu0 %v266
    %v290 = vpop.f32.mrf.mxu0
    %v291 = vadd.f32 %v54, %v290
    %292 = vdwg.mxu0
    %v293 = vmax.f32 %v285, 0.0
    %v294 = vmax.f32 %v288, 0.0
    %v295 = vmax.f32 %v291, 0.0
    %v296 = vld [vmem:[%s3 + $0x30] sm:$0xff]
    %v297 = vld [vmem:[%s3 + $0x38] sm:$0xff]
    %v299 = vsel %vm121, %v293, 0
    %v302 = vsel %vm121, %v294, 0
    %v305 = vsel %vm121, %v295, 0
    %307 = vmatpush.msra.mxu0 0.0
    %308 = vmatpush.msra.mxu0 0.0
    %309 = vmatpush.msra.mxu0 0.0
    %310 = vmatpush.msra.mxu0 0.0
    %311 = vmatpush.msra.mxu0 0.0
    %312 = vmatpush.msra.mxu0 0.0
    %313 = vmatpush.msra.mxu0 0.0
    %314 = vmatpush.msra.mxu0 0.0
    %315 = vmatpush.msra.mxu0 0.0
    %316 = vmatpush.msra.mxu0 0.0
    %317 = vmatpush.msra.mxu0 0.0
    %318 = vmatpush.msra.mxu0 0.0
    %319 = vmatpush.msra.mxu0 0.0
    %320 = vmatpush.msra.mxu0 0.0
    %321 = vmatpush.msra.mxu0 %v297
    %322 = vmatpush.msra.mxu0 %v296
    %323 = vmatmul.f32.gmra.mxu0 %v299
    %v324 = vpop.f32.mrf.mxu0
    %v325 = vadd.f32 0.0, %v324
    %326 = vmatmul.f32.gmra.mxu0 %v302
    %v327 = vpop.f32.mrf.mxu0
    %v328 = vadd.f32 0.0, %v327
    %329 = vmatmul.f32.gmra.mxu0 %v305
    %v330 = vpop.f32.mrf.mxu0
    %v331 = vadd.f32 0.0, %v330
    %332 = vdwg.mxu0
    %v333 = vadd.f32 %v261, %v325
    %v334 = vadd.f32 %v262, %v328
    %v335 = vadd.f32 %v263, %v331
    %v336 = vld [vmem:[%s0 + $0x48] sm:$0xff]
    %v337 = vld [vmem:[%s0 + $0x50] sm:$0xff]
    %v338 = vld [vmem:[%s0 + $0x58] sm:$0x3]
    %339 = vmatpush.msra.mxu0 %v48
    %340 = vmatpush.msra.mxu0 %v47
    %341 = vmatpush.msra.mxu0 %v46
    %342 = vmatpush.msra.mxu0 %v45
    %343 = vmatpush.msra.mxu0 %v44
    %344 = vmatpush.msra.mxu0 %v43
    %345 = vmatpush.msra.mxu0 %v42
    %346 = vmatpush.msra.mxu0 %v41
    %347 = vmatpush.msra.mxu0 %v40
    %348 = vmatpush.msra.mxu0 %v39
    %349 = vmatpush.msra.mxu0 %v38
    %350 = vmatpush.msra.mxu0 %v37
    %351 = vmatpush.msra.mxu0 %v36
    %352 = vmatpush.msra.mxu0 %v35
    %353 = vmatpush.msra.mxu0 %v34
    %354 = vmatpush.msra.mxu0 %v33
    %355 = vmatmul.f32.gmra.mxu0 %v336
    %v356 = vpop.f32.mrf.mxu0
    %v357 = vadd.f32 %v54, %v356
    %358 = vmatmul.f32.gmra.mxu0 %v337
    %v359 = vpop.f32.mrf.mxu0
    %v360 = vadd.f32 %v54, %v359
    %361 = vmatmul.f32.gmra.mxu0 %v338
    %v362 = vpop.f32.mrf.mxu0
    %v363 = vadd.f32 %v54, %v362
    %364 = vdwg.mxu0
    %v365 = vmax.f32 %v357, 0.0
    %v366 = vmax.f32 %v360, 0.0
    %v367 = vmax.f32 %v363, 0.0
    %v368 = vld [vmem:[%s3 + $0x40] sm:$0xff]
    %v369 = vld [vmem:[%s3 + $0x48] sm:$0xff]
    %v371 = vsel %vm121, %v365, 0
    %v374 = vsel %vm121, %v366, 0
    %v377 = vsel %vm121, %v367, 0
    %379 = vmatpush.msra.mxu0 0.0
    %380 = vmatpush.msra.mxu0 0.0
    %381 = vmatpush.msra.mxu0 0.0
    %382 = vmatpush.msra.mxu0 0.0
    %383 = vmatpush.msra.mxu0 0.0
    %384 = vmatpush.msra.mxu0 0.0
    %385 = vmatpush.msra.mxu0 0.0
    %386 = vmatpush.msra.mxu0 0.0
    %387 = vmatpush.msra.mxu0 0.0
    %388 = vmatpush.msra.mxu0 0.0
    %389 = vmatpush.msra.mxu0 0.0
    %390 = vmatpush.msra.mxu0 0.0
    %391 = vmatpush.msra.mxu0 0.0
    %392 = vmatpush.msra.mxu0 0.0
    %393 = vmatpush.msra.mxu0 %v369
    %394 = vmatpush.msra.mxu0 %v368
    %395 = vmatmul.f32.gmra.mxu0 %v371
    %v396 = vpop.f32.mrf.mxu0
    %v397 = vadd.f32 0.0, %v396
    %398 = vmatmul.f32.gmra.mxu0 %v374
    %v399 = vpop.f32.mrf.mxu0
    %v400 = vadd.f32 0.0, %v399
    %401 = vmatmul.f32.gmra.mxu0 %v377
    %v402 = vpop.f32.mrf.mxu0
    %v403 = vadd.f32 0.0, %v402
    %404 = vdwg.mxu0
    %v405 = vadd.f32 %v333, %v397
    %v406 = vadd.f32 %v334, %v400
    %v407 = vadd.f32 %v335, %v403
    %v408 = vld [vmem:[%s0 + $0x5a] sm:$0xff]
    %v409 = vld [vmem:[%s0 + $0x62] sm:$0xff]
    %v410 = vld [vmem:[%s0 + $0x6a] sm:$0x3]
    %411 = vmatpush.msra.mxu0 %v48
    %412 = vmatpush.msra.mxu0 %v47
    %413 = vmatpush.msra.mxu0 %v46
    %414 = vmatpush.msra.mxu0 %v45
    %415 = vmatpush.msra.mxu0 %v44
    %416 = vmatpush.msra.mxu0 %v43
    %417 = vmatpush.msra.mxu0 %v42
    %418 = vmatpush.msra.mxu0 %v41
    %419 = vmatpush.msra.mxu0 %v40
    %420 = vmatpush.msra.mxu0 %v39
    %421 = vmatpush.msra.mxu0 %v38
    %422 = vmatpush.msra.mxu0 %v37
    %423 = vmatpush.msra.mxu0 %v36
    %424 = vmatpush.msra.mxu0 %v35
    %425 = vmatpush.msra.mxu0 %v34
    %426 = vmatpush.msra.mxu0 %v33
    %427 = vmatmul.f32.gmra.mxu0 %v408
    %v428 = vpop.f32.mrf.mxu0
    %v429 = vadd.f32 %v54, %v428
    %430 = vmatmul.f32.gmra.mxu0 %v409
    %v431 = vpop.f32.mrf.mxu0
    %v432 = vadd.f32 %v54, %v431
    %433 = vmatmul.f32.gmra.mxu0 %v410
    %v434 = vpop.f32.mrf.mxu0
    %v435 = vadd.f32 %v54, %v434
    %436 = vdwg.mxu0
    %v437 = vmax.f32 %v429, 0.0
    %v438 = vmax.f32 %v432, 0.0
    %v439 = vmax.f32 %v435, 0.0
    %v440 = vld [vmem:[%s3 + $0x50] sm:$0xff]
    %v441 = vld [vmem:[%s3 + $0x58] sm:$0xff]
    %v443 = vsel %vm121, %v437, 0
    %v446 = vsel %vm121, %v438, 0
    %v449 = vsel %vm121, %v439, 0
    %451 = vmatpush.msra.mxu0 0.0
    %452 = vmatpush.msra.mxu0 0.0
    %453 = vmatpush.msra.mxu0 0.0
    %454 = vmatpush.msra.mxu0 0.0
    %455 = vmatpush.msra.mxu0 0.0
    %456 = vmatpush.msra.mxu0 0.0
    %457 = vmatpush.msra.mxu0 0.0
    %458 = vmatpush.msra.mxu0 0.0
    %459 = vmatpush.msra.mxu0 0.0
    %460 = vmatpush.msra.mxu0 0.0
    %461 = vmatpush.msra.mxu0 0.0
    %462 = vmatpush.msra.mxu0 0.0
    %463 = vmatpush.msra.mxu0 0.0
    %464 = vmatpush.msra.mxu0 0.0
    %465 = vmatpush.msra.mxu0 %v441
    %466 = vmatpush.msra.mxu0 %v440
    %467 = vmatmul.f32.gmra.mxu0 %v443
    %v468 = vpop.f32.mrf.mxu0
    %v469 = vadd.f32 0.0, %v468
    %470 = vmatmul.f32.gmra.mxu0 %v446
    %v471 = vpop.f32.mrf.mxu0
    %v472 = vadd.f32 0.0, %v471
    %473 = vmatmul.f32.gmra.mxu0 %v449
    %v474 = vpop.f32.mrf.mxu0
    %v475 = vadd.f32 0.0, %v474
    %476 = vdwg.mxu0
    %v477 = vadd.f32 %v405, %v469
    %v478 = vadd.f32 %v406, %v472
    %v479 = vadd.f32 %v407, %v475
    %v480 = vld [vmem:[%s0 + $0x6c] sm:$0xff]
    %v481 = vld [vmem:[%s0 + $0x74] sm:$0xff]
    %v482 = vld [vmem:[%s0 + $0x7c] sm:$0x3]
    %483 = vmatpush.msra.mxu0 %v48
    %484 = vmatpush.msra.mxu0 %v47
    %485 = vmatpush.msra.mxu0 %v46
    %486 = vmatpush.msra.mxu0 %v45
    %487 = vmatpush.msra.mxu0 %v44
    %488 = vmatpush.msra.mxu0 %v43
    %489 = vmatpush.msra.mxu0 %v42
    %490 = vmatpush.msra.mxu0 %v41
    %491 = vmatpush.msra.mxu0 %v40
    %492 = vmatpush.msra.mxu0 %v39
    %493 = vmatpush.msra.mxu0 %v38
    %494 = vmatpush.msra.mxu0 %v37
    %495 = vmatpush.msra.mxu0 %v36
    %496 = vmatpush.msra.mxu0 %v35
    %497 = vmatpush.msra.mxu0 %v34
    %498 = vmatpush.msra.mxu0 %v33
    %499 = vmatmul.f32.gmra.mxu0 %v480
    %v500 = vpop.f32.mrf.mxu0
    %v501 = vadd.f32 %v54, %v500
    %502 = vmatmul.f32.gmra.mxu0 %v481
    %v503 = vpop.f32.mrf.mxu0
    %v504 = vadd.f32 %v54, %v503
    %505 = vmatmul.f32.gmra.mxu0 %v482
    %v506 = vpop.f32.mrf.mxu0
    %v507 = vadd.f32 %v54, %v506
    %508 = vdwg.mxu0
    %v509 = vmax.f32 %v501, 0.0
    %v510 = vmax.f32 %v504, 0.0
    %v511 = vmax.f32 %v507, 0.0
    %v512 = vld [vmem:[%s3 + $0x60] sm:$0xff]
    %v513 = vld [vmem:[%s3 + $0x68] sm:$0xff]
    %v515 = vsel %vm121, %v509, 0
    %v518 = vsel %vm121, %v510, 0
    %v521 = vsel %vm121, %v511, 0
    %523 = vmatpush.msra.mxu0 0.0
    %524 = vmatpush.msra.mxu0 0.0
    %525 = vmatpush.msra.mxu0 0.0
    %526 = vmatpush.msra.mxu0 0.0
    %527 = vmatpush.msra.mxu0 0.0
    %528 = vmatpush.msra.mxu0 0.0
    %529 = vmatpush.msra.mxu0 0.0
    %530 = vmatpush.msra.mxu0 0.0
    %531 = vmatpush.msra.mxu0 0.0
    %532 = vmatpush.msra.mxu0 0.0
    %533 = vmatpush.msra.mxu0 0.0
    %534 = vmatpush.msra.mxu0 0.0
    %535 = vmatpush.msra.mxu0 0.0
    %536 = vmatpush.msra.mxu0 0.0
    %537 = vmatpush.msra.mxu0 %v513
    %538 = vmatpush.msra.mxu0 %v512
    %539 = vmatmul.f32.gmra.mxu0 %v515
    %v540 = vpop.f32.mrf.mxu0
    %v541 = vadd.f32 0.0, %v540
    %542 = vmatmul.f32.gmra.mxu0 %v518
    %v543 = vpop.f32.mrf.mxu0
    %v544 = vadd.f32 0.0, %v543
    %545 = vmatmul.f32.gmra.mxu0 %v521
    %v546 = vpop.f32.mrf.mxu0
    %v547 = vadd.f32 0.0, %v546
    %548 = vdwg.mxu0
    %v549 = vadd.f32 %v477, %v541
    %v550 = vadd.f32 %v478, %v544
    %v551 = vadd.f32 %v479, %v547
    %v552 = vld [vmem:[%s0 + $0x7e] sm:$0xff]
    %v553 = vld [vmem:[%s0 + $0x86] sm:$0xff]
    %v554 = vld [vmem:[%s0 + $0x8e] sm:$0x3]
    %555 = vmatpush.msra.mxu0 %v48
    %556 = vmatpush.msra.mxu0 %v47
    %557 = vmatpush.msra.mxu0 %v46
    %558 = vmatpush.msra.mxu0 %v45
    %559 = vmatpush.msra.mxu0 %v44
    %560 = vmatpush.msra.mxu0 %v43
    %561 = vmatpush.msra.mxu0 %v42
    %562 = vmatpush.msra.mxu0 %v41
    %563 = vmatpush.msra.mxu0 %v40
    %564 = vmatpush.msra.mxu0 %v39
    %565 = vmatpush.msra.mxu0 %v38
    %566 = vmatpush.msra.mxu0 %v37
    %567 = vmatpush.msra.mxu0 %v36
    %568 = vmatpush.msra.mxu0 %v35
    %569 = vmatpush.msra.mxu0 %v34
    %570 = vmatpush.msra.mxu0 %v33
    %571 = vmatmul.f32.gmra.mxu0 %v552
    %v572 = vpop.f32.mrf.mxu0
    %v573 = vadd.f32 %v54, %v572
    %574 = vmatmul.f32.gmra.mxu0 %v553
    %v575 = vpop.f32.mrf.mxu0
    %v576 = vadd.f32 %v54, %v575
    %577 = vmatmul.f32.gmra.mxu0 %v554
    %v578 = vpop.f32.mrf.mxu0
    %v579 = vadd.f32 %v54, %v578
    %580 = vdwg.mxu0
    %v581 = vmax.f32 %v573, 0.0
    %v582 = vmax.f32 %v576, 0.0
    %v583 = vmax.f32 %v579, 0.0
    %v584 = vld [vmem:[%s3 + $0x70] sm:$0xff]
    %v585 = vld [vmem:[%s3 + $0x78] sm:$0xff]
    %v587 = vsel %vm121, %v581, 0
    %v590 = vsel %vm121, %v582, 0
    %v593 = vsel %vm121, %v583, 0
    %595 = vmatpush.msra.mxu0 0.0
    %596 = vmatpush.msra.mxu0 0.0
    %597 = vmatpush.msra.mxu0 0.0
    %598 = vmatpush.msra.mxu0 0.0
    %599 = vmatpush.msra.mxu0 0.0
    %600 = vmatpush.msra.mxu0 0.0
    %601 = vmatpush.msra.mxu0 0.0
    %602 = vmatpush.msra.mxu0 0.0
    %603 = vmatpush.msra.mxu0 0.0
    %604 = vmatpush.msra.mxu0 0.0
    %605 = vmatpush.msra.mxu0 0.0
    %606 = vmatpush.msra.mxu0 0.0
    %607 = vmatpush.msra.mxu0 0.0
    %608 = vmatpush.msra.mxu0 0.0
    %609 = vmatpush.msra.mxu0 %v585
    %610 = vmatpush.msra.mxu0 %v584
    %611 = vmatmul.f32.gmra.mxu0 %v587
    %v612 = vpop.f32.mrf.mxu0
    %v613 = vadd.f32 0.0, %v612
    %614 = vmatmul.f32.gmra.mxu0 %v590
    %v615 = vpop.f32.mrf.mxu0
    %v616 = vadd.f32 0.0, %v615
    %617 = vmatmul.f32.gmra.mxu0 %v593
    %v618 = vpop.f32.mrf.mxu0
    %v619 = vadd.f32 0.0, %v618
    %620 = vdwg.mxu0
    %v621 = vadd.f32 %v549, %v613
    %v622 = vadd.f32 %v550, %v616
    %v623 = vadd.f32 %v551, %v619
    %v624 = vld [vmem:[%s0 + $0x90] sm:$0xff]
    %v625 = vld [vmem:[%s0 + $0x98] sm:$0xff]
    %v626 = vld [vmem:[%s0 + $0xa0] sm:$0x3]
    %627 = vmatpush.msra.mxu0 %v48
    %628 = vmatpush.msra.mxu0 %v47
    %629 = vmatpush.msra.mxu0 %v46
    %630 = vmatpush.msra.mxu0 %v45
    %631 = vmatpush.msra.mxu0 %v44
    %632 = vmatpush.msra.mxu0 %v43
    %633 = vmatpush.msra.mxu0 %v42
    %634 = vmatpush.msra.mxu0 %v41
    %635 = vmatpush.msra.mxu0 %v40
    %636 = vmatpush.msra.mxu0 %v39
    %637 = vmatpush.msra.mxu0 %v38
    %638 = vmatpush.msra.mxu0 %v37
    %639 = vmatpush.msra.mxu0 %v36
    %640 = vmatpush.msra.mxu0 %v35
    %641 = vmatpush.msra.mxu0 %v34
    %642 = vmatpush.msra.mxu0 %v33
    %643 = vmatmul.f32.gmra.mxu0 %v624
    %v644 = vpop.f32.mrf.mxu0
    %v645 = vadd.f32 %v54, %v644
    %646 = vmatmul.f32.gmra.mxu0 %v625
    %v647 = vpop.f32.mrf.mxu0
    %v648 = vadd.f32 %v54, %v647
    %649 = vmatmul.f32.gmra.mxu0 %v626
    %v650 = vpop.f32.mrf.mxu0
    %v651 = vadd.f32 %v54, %v650
    %652 = vdwg.mxu0
    %v653 = vmax.f32 %v645, 0.0
    %v654 = vmax.f32 %v648, 0.0
    %v655 = vmax.f32 %v651, 0.0
    %v656 = vld [vmem:[%s3 + $0x80] sm:$0xff]
    %v657 = vld [vmem:[%s3 + $0x88] sm:$0xff]
    %v659 = vsel %vm121, %v653, 0
    %v662 = vsel %vm121, %v654, 0
    %v665 = vsel %vm121, %v655, 0
    %667 = vmatpush.msra.mxu0 0.0
    %668 = vmatpush.msra.mxu0 0.0
    %669 = vmatpush.msra.mxu0 0.0
    %670 = vmatpush.msra.mxu0 0.0
    %671 = vmatpush.msra.mxu0 0.0
    %672 = vmatpush.msra.mxu0 0.0
    %673 = vmatpush.msra.mxu0 0.0
    %674 = vmatpush.msra.mxu0 0.0
    %675 = vmatpush.msra.mxu0 0.0
    %676 = vmatpush.msra.mxu0 0.0
    %677 = vmatpush.msra.mxu0 0.0
    %678 = vmatpush.msra.mxu0 0.0
    %679 = vmatpush.msra.mxu0 0.0
    %680 = vmatpush.msra.mxu0 0.0
    %681 = vmatpush.msra.mxu0 %v657
    %682 = vmatpush.msra.mxu0 %v656
    %683 = vmatmul.f32.gmra.mxu0 %v659
    %v684 = vpop.f32.mrf.mxu0
    %v685 = vadd.f32 0.0, %v684
    %686 = vmatmul.f32.gmra.mxu0 %v662
    %v687 = vpop.f32.mrf.mxu0
    %v688 = vadd.f32 0.0, %v687
    %689 = vmatmul.f32.gmra.mxu0 %v665
    %v690 = vpop.f32.mrf.mxu0
    %v691 = vadd.f32 0.0, %v690
    %692 = vdwg.mxu0
    %v693 = vadd.f32 %v621, %v685
    %v694 = vadd.f32 %v622, %v688
    %v695 = vadd.f32 %v623, %v691
    %v696 = vld [vmem:[%s0 + $0xa2] sm:$0xff]
    %v697 = vld [vmem:[%s0 + $0xaa] sm:$0xff]
    %v698 = vld [vmem:[%s0 + $0xb2] sm:$0x3]
    %699 = vmatpush.msra.mxu0 %v48
    %700 = vmatpush.msra.mxu0 %v47
    %701 = vmatpush.msra.mxu0 %v46
    %702 = vmatpush.msra.mxu0 %v45
    %703 = vmatpush.msra.mxu0 %v44
    %704 = vmatpush.msra.mxu0 %v43
    %705 = vmatpush.msra.mxu0 %v42
    %706 = vmatpush.msra.mxu0 %v41
    %707 = vmatpush.msra.mxu0 %v40
    %708 = vmatpush.msra.mxu0 %v39
    %709 = vmatpush.msra.mxu0 %v38
    %710 = vmatpush.msra.mxu0 %v37
    %711 = vmatpush.msra.mxu0 %v36
    %712 = vmatpush.msra.mxu0 %v35
    %713 = vmatpush.msra.mxu0 %v34
    %714 = vmatpush.msra.mxu0 %v33
    %715 = vmatmul.f32.gmra.mxu0 %v696
    %v716 = vpop.f32.mrf.mxu0
    %v717 = vadd.f32 %v54, %v716
    %718 = vmatmul.f32.gmra.mxu0 %v697
    %v719 = vpop.f32.mrf.mxu0
    %v720 = vadd.f32 %v54, %v719
    %721 = vmatmul.f32.gmra.mxu0 %v698
    %v722 = vpop.f32.mrf.mxu0
    %v723 = vadd.f32 %v54, %v722
    %724 = vdwg.mxu0
    %v725 = vmax.f32 %v717, 0.0
    %v726 = vmax.f32 %v720, 0.0
    %v727 = vmax.f32 %v723, 0.0
    %v728 = vld [vmem:[%s3 + $0x90] sm:$0xff]
    %v729 = vld [vmem:[%s3 + $0x98] sm:$0xff]
    %v731 = vsel %vm121, %v725, 0
    %v734 = vsel %vm121, %v726, 0
    %v737 = vsel %vm121, %v727, 0
    %739 = vmatpush.msra.mxu0 0.0
    %740 = vmatpush.msra.mxu0 0.0
    %741 = vmatpush.msra.mxu0 0.0
    %742 = vmatpush.msra.mxu0 0.0
    %743 = vmatpush.msra.mxu0 0.0
    %744 = vmatpush.msra.mxu0 0.0
    %745 = vmatpush.msra.mxu0 0.0
    %746 = vmatpush.msra.mxu0 0.0
    %747 = vmatpush.msra.mxu0 0.0
    %748 = vmatpush.msra.mxu0 0.0
    %749 = vmatpush.msra.mxu0 0.0
    %750 = vmatpush.msra.mxu0 0.0
    %751 = vmatpush.msra.mxu0 0.0
    %752 = vmatpush.msra.mxu0 0.0
    %753 = vmatpush.msra.mxu0 %v729
    %754 = vmatpush.msra.mxu0 %v728
    %755 = vmatmul.f32.gmra.mxu0 %v731
    %v756 = vpop.f32.mrf.mxu0
    %v757 = vadd.f32 0.0, %v756
    %758 = vmatmul.f32.gmra.mxu0 %v734
    %v759 = vpop.f32.mrf.mxu0
    %v760 = vadd.f32 0.0, %v759
    %761 = vmatmul.f32.gmra.mxu0 %v737
    %v762 = vpop.f32.mrf.mxu0
    %v763 = vadd.f32 0.0, %v762
    %764 = vdwg.mxu0
    %v765 = vadd.f32 %v693, %v757
    %v766 = vadd.f32 %v694, %v760
    %v767 = vadd.f32 %v695, %v763
    %v768 = vld [vmem:[%s0 + $0xb4] sm:$0xff]
    %v769 = vld [vmem:[%s0 + $0xbc] sm:$0xff]
    %v770 = vld [vmem:[%s0 + $0xc4] sm:$0x3]
    %771 = vmatpush.msra.mxu0 %v48
    %772 = vmatpush.msra.mxu0 %v47
    %773 = vmatpush.msra.mxu0 %v46
    %774 = vmatpush.msra.mxu0 %v45
    %775 = vmatpush.msra.mxu0 %v44
    %776 = vmatpush.msra.mxu0 %v43
    %777 = vmatpush.msra.mxu0 %v42
    %778 = vmatpush.msra.mxu0 %v41
    %779 = vmatpush.msra.mxu0 %v40
    %780 = vmatpush.msra.mxu0 %v39
    %781 = vmatpush.msra.mxu0 %v38
    %782 = vmatpush.msra.mxu0 %v37
    %783 = vmatpush.msra.mxu0 %v36
    %784 = vmatpush.msra.mxu0 %v35
    %785 = vmatpush.msra.mxu0 %v34
    %786 = vmatpush.msra.mxu0 %v33
    %787 = vmatmul.f32.gmra.mxu0 %v768
    %v788 = vpop.f32.mrf.mxu0
    %v789 = vadd.f32 %v54, %v788
    %790 = vmatmul.f32.gmra.mxu0 %v769
    %v791 = vpop.f32.mrf.mxu0
    %v792 = vadd.f32 %v54, %v791
    %793 = vmatmul.f32.gmra.mxu0 %v770
    %v794 = vpop.f32.mrf.mxu0
    %v795 = vadd.f32 %v54, %v794
    %796 = vdwg.mxu0
    %v797 = vmax.f32 %v789, 0.0
    %v798 = vmax.f32 %v792, 0.0
    %v799 = vmax.f32 %v795, 0.0
    %v800 = vld [vmem:[%s3 + $0xa0] sm:$0xff]
    %v801 = vld [vmem:[%s3 + $0xa8] sm:$0xff]
    %v803 = vsel %vm121, %v797, 0
    %v806 = vsel %vm121, %v798, 0
    %v809 = vsel %vm121, %v799, 0
    %811 = vmatpush.msra.mxu0 0.0
    %812 = vmatpush.msra.mxu0 0.0
    %813 = vmatpush.msra.mxu0 0.0
    %814 = vmatpush.msra.mxu0 0.0
    %815 = vmatpush.msra.mxu0 0.0
    %816 = vmatpush.msra.mxu0 0.0
    %817 = vmatpush.msra.mxu0 0.0
    %818 = vmatpush.msra.mxu0 0.0
    %819 = vmatpush.msra.mxu0 0.0
    %820 = vmatpush.msra.mxu0 0.0
    %821 = vmatpush.msra.mxu0 0.0
    %822 = vmatpush.msra.mxu0 0.0
    %823 = vmatpush.msra.mxu0 0.0
    %824 = vmatpush.msra.mxu0 0.0
    %825 = vmatpush.msra.mxu0 %v801
    %826 = vmatpush.msra.mxu0 %v800
    %827 = vmatmul.f32.gmra.mxu0 %v803
    %v828 = vpop.f32.mrf.mxu0
    %v829 = vadd.f32 0.0, %v828
    %830 = vmatmul.f32.gmra.mxu0 %v806
    %v831 = vpop.f32.mrf.mxu0
    %v832 = vadd.f32 0.0, %v831
    %833 = vmatmul.f32.gmra.mxu0 %v809
    %v834 = vpop.f32.mrf.mxu0
    %v835 = vadd.f32 0.0, %v834
    %836 = vdwg.mxu0
    %v837 = vadd.f32 %v765, %v829
    %v838 = vadd.f32 %v766, %v832
    %v839 = vadd.f32 %v767, %v835
    %v840 = vld [vmem:[%s0 + $0xc6] sm:$0xff]
    %v841 = vld [vmem:[%s0 + $0xce] sm:$0xff]
    %v842 = vld [vmem:[%s0 + $0xd6] sm:$0x3]
    %843 = vmatpush.msra.mxu0 %v48
    %844 = vmatpush.msra.mxu0 %v47
    %845 = vmatpush.msra.mxu0 %v46
    %846 = vmatpush.msra.mxu0 %v45
    %847 = vmatpush.msra.mxu0 %v44
    %848 = vmatpush.msra.mxu0 %v43
    %849 = vmatpush.msra.mxu0 %v42
    %850 = vmatpush.msra.mxu0 %v41
    %851 = vmatpush.msra.mxu0 %v40
    %852 = vmatpush.msra.mxu0 %v39
    %853 = vmatpush.msra.mxu0 %v38
    %854 = vmatpush.msra.mxu0 %v37
    %855 = vmatpush.msra.mxu0 %v36
    %856 = vmatpush.msra.mxu0 %v35
    %857 = vmatpush.msra.mxu0 %v34
    %858 = vmatpush.msra.mxu0 %v33
    %859 = vmatmul.f32.gmra.mxu0 %v840
    %v860 = vpop.f32.mrf.mxu0
    %v861 = vadd.f32 %v54, %v860
    %862 = vmatmul.f32.gmra.mxu0 %v841
    %v863 = vpop.f32.mrf.mxu0
    %v864 = vadd.f32 %v54, %v863
    %865 = vmatmul.f32.gmra.mxu0 %v842
    %v866 = vpop.f32.mrf.mxu0
    %v867 = vadd.f32 %v54, %v866
    %868 = vdwg.mxu0
    %v869 = vmax.f32 %v861, 0.0
    %v870 = vmax.f32 %v864, 0.0
    %v871 = vmax.f32 %v867, 0.0
    %v872 = vld [vmem:[%s3 + $0xb0] sm:$0xff]
    %v873 = vld [vmem:[%s3 + $0xb8] sm:$0xff]
    %v875 = vsel %vm121, %v869, 0
    %v878 = vsel %vm121, %v870, 0
    %v881 = vsel %vm121, %v871, 0
    %883 = vmatpush.msra.mxu0 0.0
    %884 = vmatpush.msra.mxu0 0.0
    %885 = vmatpush.msra.mxu0 0.0
    %886 = vmatpush.msra.mxu0 0.0
    %887 = vmatpush.msra.mxu0 0.0
    %888 = vmatpush.msra.mxu0 0.0
    %889 = vmatpush.msra.mxu0 0.0
    %890 = vmatpush.msra.mxu0 0.0
    %891 = vmatpush.msra.mxu0 0.0
    %892 = vmatpush.msra.mxu0 0.0
    %893 = vmatpush.msra.mxu0 0.0
    %894 = vmatpush.msra.mxu0 0.0
    %895 = vmatpush.msra.mxu0 0.0
    %896 = vmatpush.msra.mxu0 0.0
    %897 = vmatpush.msra.mxu0 %v873
    %898 = vmatpush.msra.mxu0 %v872
    %899 = vmatmul.f32.gmra.mxu0 %v875
    %v900 = vpop.f32.mrf.mxu0
    %v901 = vadd.f32 0.0, %v900
    %902 = vmatmul.f32.gmra.mxu0 %v878
    %v903 = vpop.f32.mrf.mxu0
    %v904 = vadd.f32 0.0, %v903
    %905 = vmatmul.f32.gmra.mxu0 %v881
    %v906 = vpop.f32.mrf.mxu0
    %v907 = vadd.f32 0.0, %v906
    %908 = vdwg.mxu0
    %v909 = vadd.f32 %v837, %v901
    %v910 = vadd.f32 %v838, %v904
    %v911 = vadd.f32 %v839, %v907
    %v912 = vld [vmem:[%s0 + $0xd8] sm:$0xff]
    %v913 = vld [vmem:[%s0 + $0xe0] sm:$0xff]
    %v914 = vld [vmem:[%s0 + $0xe8] sm:$0x3]
    %915 = vmatpush.msra.mxu0 %v48
    %916 = vmatpush.msra.mxu0 %v47
    %917 = vmatpush.msra.mxu0 %v46
    %918 = vmatpush.msra.mxu0 %v45
    %919 = vmatpush.msra.mxu0 %v44
    %920 = vmatpush.msra.mxu0 %v43
    %921 = vmatpush.msra.mxu0 %v42
    %922 = vmatpush.msra.mxu0 %v41
    %923 = vmatpush.msra.mxu0 %v40
    %924 = vmatpush.msra.mxu0 %v39
    %925 = vmatpush.msra.mxu0 %v38
    %926 = vmatpush.msra.mxu0 %v37
    %927 = vmatpush.msra.mxu0 %v36
    %928 = vmatpush.msra.mxu0 %v35
    %929 = vmatpush.msra.mxu0 %v34
    %930 = vmatpush.msra.mxu0 %v33
    %931 = vmatmul.f32.gmra.mxu0 %v912
    %v932 = vpop.f32.mrf.mxu0
    %v933 = vadd.f32 %v54, %v932
    %934 = vmatmul.f32.gmra.mxu0 %v913
    %v935 = vpop.f32.mrf.mxu0
    %v936 = vadd.f32 %v54, %v935
    %937 = vmatmul.f32.gmra.mxu0 %v914
    %v938 = vpop.f32.mrf.mxu0
    %v939 = vadd.f32 %v54, %v938
    %940 = vdwg.mxu0
    %v941 = vmax.f32 %v933, 0.0
    %v942 = vmax.f32 %v936, 0.0
    %v943 = vmax.f32 %v939, 0.0
    %v944 = vld [vmem:[%s3 + $0xc0] sm:$0xff]
    %v945 = vld [vmem:[%s3 + $0xc8] sm:$0xff]
    %v947 = vsel %vm121, %v941, 0
    %v950 = vsel %vm121, %v942, 0
    %v953 = vsel %vm121, %v943, 0
    %955 = vmatpush.msra.mxu0 0.0
    %956 = vmatpush.msra.mxu0 0.0
    %957 = vmatpush.msra.mxu0 0.0
    %958 = vmatpush.msra.mxu0 0.0
    %959 = vmatpush.msra.mxu0 0.0
    %960 = vmatpush.msra.mxu0 0.0
    %961 = vmatpush.msra.mxu0 0.0
    %962 = vmatpush.msra.mxu0 0.0
    %963 = vmatpush.msra.mxu0 0.0
    %964 = vmatpush.msra.mxu0 0.0
    %965 = vmatpush.msra.mxu0 0.0
    %966 = vmatpush.msra.mxu0 0.0
    %967 = vmatpush.msra.mxu0 0.0
    %968 = vmatpush.msra.mxu0 0.0
    %969 = vmatpush.msra.mxu0 %v945
    %970 = vmatpush.msra.mxu0 %v944
    %971 = vmatmul.f32.gmra.mxu0 %v947
    %v972 = vpop.f32.mrf.mxu0
    %v973 = vadd.f32 0.0, %v972
    %974 = vmatmul.f32.gmra.mxu0 %v950
    %v975 = vpop.f32.mrf.mxu0
    %v976 = vadd.f32 0.0, %v975
    %977 = vmatmul.f32.gmra.mxu0 %v953
    %v978 = vpop.f32.mrf.mxu0
    %v979 = vadd.f32 0.0, %v978
    %980 = vdwg.mxu0
    %v981 = vadd.f32 %v909, %v973
    %v982 = vadd.f32 %v910, %v976
    %v983 = vadd.f32 %v911, %v979
    %v984 = vld [vmem:[%s0 + $0xea] sm:$0xff]
    %v985 = vld [vmem:[%s0 + $0xf2] sm:$0xff]
    %v986 = vld [vmem:[%s0 + $0xfa] sm:$0x3]
    %987 = vmatpush.msra.mxu0 %v48
    %988 = vmatpush.msra.mxu0 %v47
    %989 = vmatpush.msra.mxu0 %v46
    %990 = vmatpush.msra.mxu0 %v45
    %991 = vmatpush.msra.mxu0 %v44
    %992 = vmatpush.msra.mxu0 %v43
    %993 = vmatpush.msra.mxu0 %v42
    %994 = vmatpush.msra.mxu0 %v41
    %995 = vmatpush.msra.mxu0 %v40
    %996 = vmatpush.msra.mxu0 %v39
    %997 = vmatpush.msra.mxu0 %v38
    %998 = vmatpush.msra.mxu0 %v37
    %999 = vmatpush.msra.mxu0 %v36
    %1000 = vmatpush.msra.mxu0 %v35
    %1001 = vmatpush.msra.mxu0 %v34
    %1002 = vmatpush.msra.mxu0 %v33
    %1003 = vmatmul.f32.gmra.mxu0 %v984
    %v1004 = vpop.f32.mrf.mxu0
    %v1005 = vadd.f32 %v54, %v1004
    %1006 = vmatmul.f32.gmra.mxu0 %v985
    %v1007 = vpop.f32.mrf.mxu0
    %v1008 = vadd.f32 %v54, %v1007
    %1009 = vmatmul.f32.gmra.mxu0 %v986
    %v1010 = vpop.f32.mrf.mxu0
    %v1011 = vadd.f32 %v54, %v1010
    %1012 = vdwg.mxu0
    %v1013 = vmax.f32 %v1005, 0.0
    %v1014 = vmax.f32 %v1008, 0.0
    %v1015 = vmax.f32 %v1011, 0.0
    %v1016 = vld [vmem:[%s3 + $0xd0] sm:$0xff]
    %v1017 = vld [vmem:[%s3 + $0xd8] sm:$0xff]
    %v1019 = vsel %vm121, %v1013, 0
    %v1022 = vsel %vm121, %v1014, 0
    %v1025 = vsel %vm121, %v1015, 0
    %1027 = vmatpush.msra.mxu0 0.0
    %1028 = vmatpush.msra.mxu0 0.0
    %1029 = vmatpush.msra.mxu0 0.0
    %1030 = vmatpush.msra.mxu0 0.0
    %1031 = vmatpush.msra.mxu0 0.0
    %1032 = vmatpush.msra.mxu0 0.0
    %1033 = vmatpush.msra.mxu0 0.0
    %1034 = vmatpush.msra.mxu0 0.0
    %1035 = vmatpush.msra.mxu0 0.0
    %1036 = vmatpush.msra.mxu0 0.0
    %1037 = vmatpush.msra.mxu0 0.0
    %1038 = vmatpush.msra.mxu0 0.0
    %1039 = vmatpush.msra.mxu0 0.0
    %1040 = vmatpush.msra.mxu0 0.0
    %1041 = vmatpush.msra.mxu0 %v1017
    %1042 = vmatpush.msra.mxu0 %v1016
    %1043 = vmatmul.f32.gmra.mxu0 %v1019
    %v1044 = vpop.f32.mrf.mxu0
    %v1045 = vadd.f32 0.0, %v1044
    %1046 = vmatmul.f32.gmra.mxu0 %v1022
    %v1047 = vpop.f32.mrf.mxu0
    %v1048 = vadd.f32 0.0, %v1047
    %1049 = vmatmul.f32.gmra.mxu0 %v1025
    %v1050 = vpop.f32.mrf.mxu0
    %v1051 = vadd.f32 0.0, %v1050
    %1052 = vdwg.mxu0
    %v1053 = vadd.f32 %v981, %v1045
    %v1054 = vadd.f32 %v982, %v1048
    %v1055 = vadd.f32 %v983, %v1051
    %v1056 = vld [vmem:[%s0 + $0xfc] sm:$0xff]
    %v1057 = vld [vmem:[%s0 + $0x104] sm:$0xff]
    %v1058 = vld [vmem:[%s0 + $0x10c] sm:$0x3]
    %1059 = vmatpush.msra.mxu0 %v48
    %1060 = vmatpush.msra.mxu0 %v47
    %1061 = vmatpush.msra.mxu0 %v46
    %1062 = vmatpush.msra.mxu0 %v45
    %1063 = vmatpush.msra.mxu0 %v44
    %1064 = vmatpush.msra.mxu0 %v43
    %1065 = vmatpush.msra.mxu0 %v42
    %1066 = vmatpush.msra.mxu0 %v41
    %1067 = vmatpush.msra.mxu0 %v40
    %1068 = vmatpush.msra.mxu0 %v39
    %1069 = vmatpush.msra.mxu0 %v38
    %1070 = vmatpush.msra.mxu0 %v37
    %1071 = vmatpush.msra.mxu0 %v36
    %1072 = vmatpush.msra.mxu0 %v35
    %1073 = vmatpush.msra.mxu0 %v34
    %1074 = vmatpush.msra.mxu0 %v33
    %1075 = vmatmul.f32.gmra.mxu0 %v1056
    %v1076 = vpop.f32.mrf.mxu0
    %v1077 = vadd.f32 %v54, %v1076
    %1078 = vmatmul.f32.gmra.mxu0 %v1057
    %v1079 = vpop.f32.mrf.mxu0
    %v1080 = vadd.f32 %v54, %v1079
    %1081 = vmatmul.f32.gmra.mxu0 %v1058
    %v1082 = vpop.f32.mrf.mxu0
    %v1083 = vadd.f32 %v54, %v1082
    %1084 = vdwg.mxu0
    %v1085 = vmax.f32 %v1077, 0.0
    %v1086 = vmax.f32 %v1080, 0.0
    %v1087 = vmax.f32 %v1083, 0.0
    %v1088 = vld [vmem:[%s3 + $0xe0] sm:$0xff]
    %v1089 = vld [vmem:[%s3 + $0xe8] sm:$0xff]
    %v1091 = vsel %vm121, %v1085, 0
    %v1094 = vsel %vm121, %v1086, 0
    %v1097 = vsel %vm121, %v1087, 0
    %1099 = vmatpush.msra.mxu0 0.0
    %1100 = vmatpush.msra.mxu0 0.0
    %1101 = vmatpush.msra.mxu0 0.0
    %1102 = vmatpush.msra.mxu0 0.0
    %1103 = vmatpush.msra.mxu0 0.0
    %1104 = vmatpush.msra.mxu0 0.0
    %1105 = vmatpush.msra.mxu0 0.0
    %1106 = vmatpush.msra.mxu0 0.0
    %1107 = vmatpush.msra.mxu0 0.0
    %1108 = vmatpush.msra.mxu0 0.0
    %1109 = vmatpush.msra.mxu0 0.0
    %1110 = vmatpush.msra.mxu0 0.0
    %1111 = vmatpush.msra.mxu0 0.0
    %1112 = vmatpush.msra.mxu0 0.0
    %1113 = vmatpush.msra.mxu0 %v1089
    %1114 = vmatpush.msra.mxu0 %v1088
    %1115 = vmatmul.f32.gmra.mxu0 %v1091
    %v1116 = vpop.f32.mrf.mxu0
    %v1117 = vadd.f32 0.0, %v1116
    %1118 = vmatmul.f32.gmra.mxu0 %v1094
    %v1119 = vpop.f32.mrf.mxu0
    %v1120 = vadd.f32 0.0, %v1119
    %1121 = vmatmul.f32.gmra.mxu0 %v1097
    %v1122 = vpop.f32.mrf.mxu0
    %v1123 = vadd.f32 0.0, %v1122
    %1124 = vdwg.mxu0
    %v1125 = vadd.f32 %v1053, %v1117
    %v1126 = vadd.f32 %v1054, %v1120
    %v1127 = vadd.f32 %v1055, %v1123
    %v1128 = vld [vmem:[%s0 + $0x10e] sm:$0xff]
    %v1129 = vld [vmem:[%s0 + $0x116] sm:$0xff]
    %v1130 = vld [vmem:[%s0 + $0x11e] sm:$0x3]
    %1131 = vmatpush.msra.mxu0 %v48
    %1132 = vmatpush.msra.mxu0 %v47
    %1133 = vmatpush.msra.mxu0 %v46
    %1134 = vmatpush.msra.mxu0 %v45
    %1135 = vmatpush.msra.mxu0 %v44
    %1136 = vmatpush.msra.mxu0 %v43
    %1137 = vmatpush.msra.mxu0 %v42
    %1138 = vmatpush.msra.mxu0 %v41
    %1139 = vmatpush.msra.mxu0 %v40
    %1140 = vmatpush.msra.mxu0 %v39
    %1141 = vmatpush.msra.mxu0 %v38
    %1142 = vmatpush.msra.mxu0 %v37
    %1143 = vmatpush.msra.mxu0 %v36
    %1144 = vmatpush.msra.mxu0 %v35
    %1145 = vmatpush.msra.mxu0 %v34
    %1146 = vmatpush.msra.mxu0 %v33
    %1147 = vmatmul.f32.gmra.mxu0 %v1128
    %v1148 = vpop.f32.mrf.mxu0
    %v1149 = vadd.f32 %v54, %v1148
    %1150 = vmatmul.f32.gmra.mxu0 %v1129
    %v1151 = vpop.f32.mrf.mxu0
    %v1152 = vadd.f32 %v54, %v1151
    %1153 = vmatmul.f32.gmra.mxu0 %v1130
    %v1154 = vpop.f32.mrf.mxu0
    %v1155 = vadd.f32 %v54, %v1154
    %1156 = vdwg.mxu0
    %v1157 = vmax.f32 %v1149, 0.0
    %v1158 = vmax.f32 %v1152, 0.0
    %v1159 = vmax.f32 %v1155, 0.0
    %v1160 = vld [vmem:[%s3 + $0xf0] sm:$0xff]
    %v1161 = vld [vmem:[%s3 + $0xf8] sm:$0xff]
    %v1163 = vsel %vm121, %v1157, 0
    %v1166 = vsel %vm121, %v1158, 0
    %v1169 = vsel %vm121, %v1159, 0
    %1171 = vmatpush.msra.mxu0 0.0
    %1172 = vmatpush.msra.mxu0 0.0
    %1173 = vmatpush.msra.mxu0 0.0
    %1174 = vmatpush.msra.mxu0 0.0
    %1175 = vmatpush.msra.mxu0 0.0
    %1176 = vmatpush.msra.mxu0 0.0
    %1177 = vmatpush.msra.mxu0 0.0
    %1178 = vmatpush.msra.mxu0 0.0
    %1179 = vmatpush.msra.mxu0 0.0
    %1180 = vmatpush.msra.mxu0 0.0
    %1181 = vmatpush.msra.mxu0 0.0
    %1182 = vmatpush.msra.mxu0 0.0
    %1183 = vmatpush.msra.mxu0 0.0
    %1184 = vmatpush.msra.mxu0 0.0
    %1185 = vmatpush.msra.mxu0 %v1161
    %1186 = vmatpush.msra.mxu0 %v1160
    %1187 = vmatmul.f32.gmra.mxu0 %v1163
    %v1188 = vpop.f32.mrf.mxu0
    %v1189 = vadd.f32 0.0, %v1188
    %1190 = vmatmul.f32.gmra.mxu0 %v1166
    %v1191 = vpop.f32.mrf.mxu0
    %v1192 = vadd.f32 0.0, %v1191
    %1193 = vmatmul.f32.gmra.mxu0 %v1169
    %v1194 = vpop.f32.mrf.mxu0
    %v1195 = vadd.f32 0.0, %v1194
    %1196 = vdwg.mxu0
    %v1197 = vadd.f32 %v1125, %v1189
    %v1198 = vadd.f32 %v1126, %v1192
    %v1199 = vadd.f32 %v1127, %v1195
    %v1200 = vld [vmem:[%s0 + $0x120] sm:$0xff]
    %v1201 = vld [vmem:[%s0 + $0x128] sm:$0xff]
    %v1202 = vld [vmem:[%s0 + $0x130] sm:$0x3]
    %1203 = vmatpush.msra.mxu0 %v48
    %1204 = vmatpush.msra.mxu0 %v47
    %1205 = vmatpush.msra.mxu0 %v46
    %1206 = vmatpush.msra.mxu0 %v45
    %1207 = vmatpush.msra.mxu0 %v44
    %1208 = vmatpush.msra.mxu0 %v43
    %1209 = vmatpush.msra.mxu0 %v42
    %1210 = vmatpush.msra.mxu0 %v41
    %1211 = vmatpush.msra.mxu0 %v40
    %1212 = vmatpush.msra.mxu0 %v39
    %1213 = vmatpush.msra.mxu0 %v38
    %1214 = vmatpush.msra.mxu0 %v37
    %1215 = vmatpush.msra.mxu0 %v36
    %1216 = vmatpush.msra.mxu0 %v35
    %1217 = vmatpush.msra.mxu0 %v34
    %1218 = vmatpush.msra.mxu0 %v33
    %1219 = vmatmul.f32.gmra.mxu0 %v1200
    %v1220 = vpop.f32.mrf.mxu0
    %v1221 = vadd.f32 %v54, %v1220
    %1222 = vmatmul.f32.gmra.mxu0 %v1201
    %v1223 = vpop.f32.mrf.mxu0
    %v1224 = vadd.f32 %v54, %v1223
    %1225 = vmatmul.f32.gmra.mxu0 %v1202
    %v1226 = vpop.f32.mrf.mxu0
    %v1227 = vadd.f32 %v54, %v1226
    %1228 = vdwg.mxu0
    %v1229 = vmax.f32 %v1221, 0.0
    %v1230 = vmax.f32 %v1224, 0.0
    %v1231 = vmax.f32 %v1227, 0.0
    %v1232 = vld [vmem:[%s3 + $0x100] sm:$0xff]
    %v1233 = vld [vmem:[%s3 + $0x108] sm:$0xff]
    %v1235 = vsel %vm121, %v1229, 0
    %v1238 = vsel %vm121, %v1230, 0
    %v1241 = vsel %vm121, %v1231, 0
    %1243 = vmatpush.msra.mxu0 0.0
    %1244 = vmatpush.msra.mxu0 0.0
    %1245 = vmatpush.msra.mxu0 0.0
    %1246 = vmatpush.msra.mxu0 0.0
    %1247 = vmatpush.msra.mxu0 0.0
    %1248 = vmatpush.msra.mxu0 0.0
    %1249 = vmatpush.msra.mxu0 0.0
    %1250 = vmatpush.msra.mxu0 0.0
    %1251 = vmatpush.msra.mxu0 0.0
    %1252 = vmatpush.msra.mxu0 0.0
    %1253 = vmatpush.msra.mxu0 0.0
    %1254 = vmatpush.msra.mxu0 0.0
    %1255 = vmatpush.msra.mxu0 0.0
    %1256 = vmatpush.msra.mxu0 0.0
    %1257 = vmatpush.msra.mxu0 %v1233
    %1258 = vmatpush.msra.mxu0 %v1232
    %1259 = vmatmul.f32.gmra.mxu0 %v1235
    %v1260 = vpop.f32.mrf.mxu0
    %v1261 = vadd.f32 0.0, %v1260
    %1262 = vmatmul.f32.gmra.mxu0 %v1238
    %v1263 = vpop.f32.mrf.mxu0
    %v1264 = vadd.f32 0.0, %v1263
    %1265 = vmatmul.f32.gmra.mxu0 %v1241
    %v1266 = vpop.f32.mrf.mxu0
    %v1267 = vadd.f32 0.0, %v1266
    %1268 = vdwg.mxu0
    %v1269 = vadd.f32 %v1197, %v1261
    %v1270 = vadd.f32 %v1198, %v1264
    %v1271 = vadd.f32 %v1199, %v1267
    %v1272 = vld [vmem:[%s0 + $0x132] sm:$0xff]
    %v1273 = vld [vmem:[%s0 + $0x13a] sm:$0xff]
    %v1274 = vld [vmem:[%s0 + $0x142] sm:$0x3]
    %1275 = vmatpush.msra.mxu0 %v48
    %1276 = vmatpush.msra.mxu0 %v47
    %1277 = vmatpush.msra.mxu0 %v46
    %1278 = vmatpush.msra.mxu0 %v45
    %1279 = vmatpush.msra.mxu0 %v44
    %1280 = vmatpush.msra.mxu0 %v43
    %1281 = vmatpush.msra.mxu0 %v42
    %1282 = vmatpush.msra.mxu0 %v41
    %1283 = vmatpush.msra.mxu0 %v40
    %1284 = vmatpush.msra.mxu0 %v39
    %1285 = vmatpush.msra.mxu0 %v38
    %1286 = vmatpush.msra.mxu0 %v37
    %1287 = vmatpush.msra.mxu0 %v36
    %1288 = vmatpush.msra.mxu0 %v35
    %1289 = vmatpush.msra.mxu0 %v34
    %1290 = vmatpush.msra.mxu0 %v33
    %1291 = vmatmul.f32.gmra.mxu0 %v1272
    %v1292 = vpop.f32.mrf.mxu0
    %v1293 = vadd.f32 %v54, %v1292
    %1294 = vmatmul.f32.gmra.mxu0 %v1273
    %v1295 = vpop.f32.mrf.mxu0
    %v1296 = vadd.f32 %v54, %v1295
    %1297 = vmatmul.f32.gmra.mxu0 %v1274
    %v1298 = vpop.f32.mrf.mxu0
    %v1299 = vadd.f32 %v54, %v1298
    %1300 = vdwg.mxu0
    %v1301 = vmax.f32 %v1293, 0.0
    %v1302 = vmax.f32 %v1296, 0.0
    %v1303 = vmax.f32 %v1299, 0.0
    %v1304 = vld [vmem:[%s3 + $0x110] sm:$0xff]
    %v1305 = vld [vmem:[%s3 + $0x118] sm:$0xff]
    %v1307 = vsel %vm121, %v1301, 0
    %v1310 = vsel %vm121, %v1302, 0
    %v1313 = vsel %vm121, %v1303, 0
    %1315 = vmatpush.msra.mxu0 0.0
    %1316 = vmatpush.msra.mxu0 0.0
    %1317 = vmatpush.msra.mxu0 0.0
    %1318 = vmatpush.msra.mxu0 0.0
    %1319 = vmatpush.msra.mxu0 0.0
    %1320 = vmatpush.msra.mxu0 0.0
    %1321 = vmatpush.msra.mxu0 0.0
    %1322 = vmatpush.msra.mxu0 0.0
    %1323 = vmatpush.msra.mxu0 0.0
    %1324 = vmatpush.msra.mxu0 0.0
    %1325 = vmatpush.msra.mxu0 0.0
    %1326 = vmatpush.msra.mxu0 0.0
    %1327 = vmatpush.msra.mxu0 0.0
    %1328 = vmatpush.msra.mxu0 0.0
    %1329 = vmatpush.msra.mxu0 %v1305
    %1330 = vmatpush.msra.mxu0 %v1304
    %1331 = vmatmul.f32.gmra.mxu0 %v1307
    %v1332 = vpop.f32.mrf.mxu0
    %v1333 = vadd.f32 0.0, %v1332
    %1334 = vmatmul.f32.gmra.mxu0 %v1310
    %v1335 = vpop.f32.mrf.mxu0
    %v1336 = vadd.f32 0.0, %v1335
    %1337 = vmatmul.f32.gmra.mxu0 %v1313
    %v1338 = vpop.f32.mrf.mxu0
    %v1339 = vadd.f32 0.0, %v1338
    %1340 = vdwg.mxu0
    %v1341 = vadd.f32 %v1269, %v1333
    %v1342 = vadd.f32 %v1270, %v1336
    %v1343 = vadd.f32 %v1271, %v1339
    %v1344 = vld [vmem:[%s0 + $0x144] sm:$0xff]
    %v1345 = vld [vmem:[%s0 + $0x14c] sm:$0xff]
    %v1346 = vld [vmem:[%s0 + $0x154] sm:$0x3]
    %1347 = vmatpush.msra.mxu0 %v48
    %1348 = vmatpush.msra.mxu0 %v47
    %1349 = vmatpush.msra.mxu0 %v46
    %1350 = vmatpush.msra.mxu0 %v45
    %1351 = vmatpush.msra.mxu0 %v44
    %1352 = vmatpush.msra.mxu0 %v43
    %1353 = vmatpush.msra.mxu0 %v42
    %1354 = vmatpush.msra.mxu0 %v41
    %1355 = vmatpush.msra.mxu0 %v40
    %1356 = vmatpush.msra.mxu0 %v39
    %1357 = vmatpush.msra.mxu0 %v38
    %1358 = vmatpush.msra.mxu0 %v37
    %1359 = vmatpush.msra.mxu0 %v36
    %1360 = vmatpush.msra.mxu0 %v35
    %1361 = vmatpush.msra.mxu0 %v34
    %1362 = vmatpush.msra.mxu0 %v33
    %1363 = vmatmul.f32.gmra.mxu0 %v1344
    %v1364 = vpop.f32.mrf.mxu0
    %v1365 = vadd.f32 %v54, %v1364
    %1366 = vmatmul.f32.gmra.mxu0 %v1345
    %v1367 = vpop.f32.mrf.mxu0
    %v1368 = vadd.f32 %v54, %v1367
    %1369 = vmatmul.f32.gmra.mxu0 %v1346
    %v1370 = vpop.f32.mrf.mxu0
    %v1371 = vadd.f32 %v54, %v1370
    %1372 = vdwg.mxu0
    %v1373 = vmax.f32 %v1365, 0.0
    %v1374 = vmax.f32 %v1368, 0.0
    %v1375 = vmax.f32 %v1371, 0.0
    %v1376 = vld [vmem:[%s3 + $0x120] sm:$0xff]
    %v1377 = vld [vmem:[%s3 + $0x128] sm:$0xff]
    %v1379 = vsel %vm121, %v1373, 0
    %v1382 = vsel %vm121, %v1374, 0
    %v1385 = vsel %vm121, %v1375, 0
    %1387 = vmatpush.msra.mxu0 0.0
    %1388 = vmatpush.msra.mxu0 0.0
    %1389 = vmatpush.msra.mxu0 0.0
    %1390 = vmatpush.msra.mxu0 0.0
    %1391 = vmatpush.msra.mxu0 0.0
    %1392 = vmatpush.msra.mxu0 0.0
    %1393 = vmatpush.msra.mxu0 0.0
    %1394 = vmatpush.msra.mxu0 0.0
    %1395 = vmatpush.msra.mxu0 0.0
    %1396 = vmatpush.msra.mxu0 0.0
    %1397 = vmatpush.msra.mxu0 0.0
    %1398 = vmatpush.msra.mxu0 0.0
    %1399 = vmatpush.msra.mxu0 0.0
    %1400 = vmatpush.msra.mxu0 0.0
    %1401 = vmatpush.msra.mxu0 %v1377
    %1402 = vmatpush.msra.mxu0 %v1376
    %1403 = vmatmul.f32.gmra.mxu0 %v1379
    %v1404 = vpop.f32.mrf.mxu0
    %v1405 = vadd.f32 0.0, %v1404
    %1406 = vmatmul.f32.gmra.mxu0 %v1382
    %v1407 = vpop.f32.mrf.mxu0
    %v1408 = vadd.f32 0.0, %v1407
    %1409 = vmatmul.f32.gmra.mxu0 %v1385
    %v1410 = vpop.f32.mrf.mxu0
    %v1411 = vadd.f32 0.0, %v1410
    %1412 = vdwg.mxu0
    %v1413 = vadd.f32 %v1341, %v1405
    %v1414 = vadd.f32 %v1342, %v1408
    %v1415 = vadd.f32 %v1343, %v1411
    %v1416 = vld [vmem:[%s0 + $0x156] sm:$0xff]
    %v1417 = vld [vmem:[%s0 + $0x15e] sm:$0xff]
    %v1418 = vld [vmem:[%s0 + $0x166] sm:$0x3]
    %1419 = vmatpush.msra.mxu0 %v48
    %1420 = vmatpush.msra.mxu0 %v47
    %1421 = vmatpush.msra.mxu0 %v46
    %1422 = vmatpush.msra.mxu0 %v45
    %1423 = vmatpush.msra.mxu0 %v44
    %1424 = vmatpush.msra.mxu0 %v43
    %1425 = vmatpush.msra.mxu0 %v42
    %1426 = vmatpush.msra.mxu0 %v41
    %1427 = vmatpush.msra.mxu0 %v40
    %1428 = vmatpush.msra.mxu0 %v39
    %1429 = vmatpush.msra.mxu0 %v38
    %1430 = vmatpush.msra.mxu0 %v37
    %1431 = vmatpush.msra.mxu0 %v36
    %1432 = vmatpush.msra.mxu0 %v35
    %1433 = vmatpush.msra.mxu0 %v34
    %1434 = vmatpush.msra.mxu0 %v33
    %1435 = vmatmul.f32.gmra.mxu0 %v1416
    %v1436 = vpop.f32.mrf.mxu0
    %v1437 = vadd.f32 %v54, %v1436
    %1438 = vmatmul.f32.gmra.mxu0 %v1417
    %v1439 = vpop.f32.mrf.mxu0
    %v1440 = vadd.f32 %v54, %v1439
    %1441 = vmatmul.f32.gmra.mxu0 %v1418
    %v1442 = vpop.f32.mrf.mxu0
    %v1443 = vadd.f32 %v54, %v1442
    %1444 = vdwg.mxu0
    %v1445 = vmax.f32 %v1437, 0.0
    %v1446 = vmax.f32 %v1440, 0.0
    %v1447 = vmax.f32 %v1443, 0.0
    %v1448 = vld [vmem:[%s3 + $0x130] sm:$0xff]
    %v1449 = vld [vmem:[%s3 + $0x138] sm:$0xff]
    %v1451 = vsel %vm121, %v1445, 0
    %v1454 = vsel %vm121, %v1446, 0
    %v1457 = vsel %vm121, %v1447, 0
    %1459 = vmatpush.msra.mxu0 0.0
    %1460 = vmatpush.msra.mxu0 0.0
    %1461 = vmatpush.msra.mxu0 0.0
    %1462 = vmatpush.msra.mxu0 0.0
    %1463 = vmatpush.msra.mxu0 0.0
    %1464 = vmatpush.msra.mxu0 0.0
    %1465 = vmatpush.msra.mxu0 0.0
    %1466 = vmatpush.msra.mxu0 0.0
    %1467 = vmatpush.msra.mxu0 0.0
    %1468 = vmatpush.msra.mxu0 0.0
    %1469 = vmatpush.msra.mxu0 0.0
    %1470 = vmatpush.msra.mxu0 0.0
    %1471 = vmatpush.msra.mxu0 0.0
    %1472 = vmatpush.msra.mxu0 0.0
    %1473 = vmatpush.msra.mxu0 %v1449
    %1474 = vmatpush.msra.mxu0 %v1448
    %1475 = vmatmul.f32.gmra.mxu0 %v1451
    %v1476 = vpop.f32.mrf.mxu0
    %v1477 = vadd.f32 0.0, %v1476
    %1478 = vmatmul.f32.gmra.mxu0 %v1454
    %v1479 = vpop.f32.mrf.mxu0
    %v1480 = vadd.f32 0.0, %v1479
    %1481 = vmatmul.f32.gmra.mxu0 %v1457
    %v1482 = vpop.f32.mrf.mxu0
    %v1483 = vadd.f32 0.0, %v1482
    %1484 = vdwg.mxu0
    %v1485 = vadd.f32 %v1413, %v1477
    %v1486 = vadd.f32 %v1414, %v1480
    %v1487 = vadd.f32 %v1415, %v1483
    %v1488 = vld [vmem:[%s0 + $0x168] sm:$0xff]
    %v1489 = vld [vmem:[%s0 + $0x170] sm:$0xff]
    %v1490 = vld [vmem:[%s0 + $0x178] sm:$0x3]
    %1491 = vmatpush.msra.mxu0 %v48
    %1492 = vmatpush.msra.mxu0 %v47
    %1493 = vmatpush.msra.mxu0 %v46
    %1494 = vmatpush.msra.mxu0 %v45
    %1495 = vmatpush.msra.mxu0 %v44
    %1496 = vmatpush.msra.mxu0 %v43
    %1497 = vmatpush.msra.mxu0 %v42
    %1498 = vmatpush.msra.mxu0 %v41
    %1499 = vmatpush.msra.mxu0 %v40
    %1500 = vmatpush.msra.mxu0 %v39
    %1501 = vmatpush.msra.mxu0 %v38
    %1502 = vmatpush.msra.mxu0 %v37
    %1503 = vmatpush.msra.mxu0 %v36
    %1504 = vmatpush.msra.mxu0 %v35
    %1505 = vmatpush.msra.mxu0 %v34
    %1506 = vmatpush.msra.mxu0 %v33
    %1507 = vmatmul.f32.gmra.mxu0 %v1488
    %v1508 = vpop.f32.mrf.mxu0
    %v1509 = vadd.f32 %v54, %v1508
    %1510 = vmatmul.f32.gmra.mxu0 %v1489
    %v1511 = vpop.f32.mrf.mxu0
    %v1512 = vadd.f32 %v54, %v1511
    %1513 = vmatmul.f32.gmra.mxu0 %v1490
    %v1514 = vpop.f32.mrf.mxu0
    %v1515 = vadd.f32 %v54, %v1514
    %1516 = vdwg.mxu0
    %v1517 = vmax.f32 %v1509, 0.0
    %v1518 = vmax.f32 %v1512, 0.0
    %v1519 = vmax.f32 %v1515, 0.0
    %v1520 = vld [vmem:[%s3 + $0x140] sm:$0xff]
    %v1521 = vld [vmem:[%s3 + $0x148] sm:$0xff]
    %v1523 = vsel %vm121, %v1517, 0
    %v1526 = vsel %vm121, %v1518, 0
    %v1529 = vsel %vm121, %v1519, 0
    %1531 = vmatpush.msra.mxu0 0.0
    %1532 = vmatpush.msra.mxu0 0.0
    %1533 = vmatpush.msra.mxu0 0.0
    %1534 = vmatpush.msra.mxu0 0.0
    %1535 = vmatpush.msra.mxu0 0.0
    %1536 = vmatpush.msra.mxu0 0.0
    %1537 = vmatpush.msra.mxu0 0.0
    %1538 = vmatpush.msra.mxu0 0.0
    %1539 = vmatpush.msra.mxu0 0.0
    %1540 = vmatpush.msra.mxu0 0.0
    %1541 = vmatpush.msra.mxu0 0.0
    %1542 = vmatpush.msra.mxu0 0.0
    %1543 = vmatpush.msra.mxu0 0.0
    %1544 = vmatpush.msra.mxu0 0.0
    %1545 = vmatpush.msra.mxu0 %v1521
    %1546 = vmatpush.msra.mxu0 %v1520
    %1547 = vmatmul.f32.gmra.mxu0 %v1523
    %v1548 = vpop.f32.mrf.mxu0
    %v1549 = vadd.f32 0.0, %v1548
    %1550 = vmatmul.f32.gmra.mxu0 %v1526
    %v1551 = vpop.f32.mrf.mxu0
    %v1552 = vadd.f32 0.0, %v1551
    %1553 = vmatmul.f32.gmra.mxu0 %v1529
    %v1554 = vpop.f32.mrf.mxu0
    %v1555 = vadd.f32 0.0, %v1554
    %1556 = vdwg.mxu0
    %v1557 = vadd.f32 %v1485, %v1549
    %v1558 = vadd.f32 %v1486, %v1552
    %v1559 = vadd.f32 %v1487, %v1555
    %v1560 = vld [vmem:[%s0 + $0x17a] sm:$0xff]
    %v1561 = vld [vmem:[%s0 + $0x182] sm:$0xff]
    %v1562 = vld [vmem:[%s0 + $0x18a] sm:$0x3]
    %1563 = vmatpush.msra.mxu0 %v48
    %1564 = vmatpush.msra.mxu0 %v47
    %1565 = vmatpush.msra.mxu0 %v46
    %1566 = vmatpush.msra.mxu0 %v45
    %1567 = vmatpush.msra.mxu0 %v44
    %1568 = vmatpush.msra.mxu0 %v43
    %1569 = vmatpush.msra.mxu0 %v42
    %1570 = vmatpush.msra.mxu0 %v41
    %1571 = vmatpush.msra.mxu0 %v40
    %1572 = vmatpush.msra.mxu0 %v39
    %1573 = vmatpush.msra.mxu0 %v38
    %1574 = vmatpush.msra.mxu0 %v37
    %1575 = vmatpush.msra.mxu0 %v36
    %1576 = vmatpush.msra.mxu0 %v35
    %1577 = vmatpush.msra.mxu0 %v34
    %1578 = vmatpush.msra.mxu0 %v33
    %1579 = vmatmul.f32.gmra.mxu0 %v1560
    %v1580 = vpop.f32.mrf.mxu0
    %v1581 = vadd.f32 %v54, %v1580
    %1582 = vmatmul.f32.gmra.mxu0 %v1561
    %v1583 = vpop.f32.mrf.mxu0
    %v1584 = vadd.f32 %v54, %v1583
    %1585 = vmatmul.f32.gmra.mxu0 %v1562
    %v1586 = vpop.f32.mrf.mxu0
    %v1587 = vadd.f32 %v54, %v1586
    %1588 = vdwg.mxu0
    %v1589 = vmax.f32 %v1581, 0.0
    %v1590 = vmax.f32 %v1584, 0.0
    %v1591 = vmax.f32 %v1587, 0.0
    %v1592 = vld [vmem:[%s3 + $0x150] sm:$0xff]
    %v1593 = vld [vmem:[%s3 + $0x158] sm:$0xff]
    %v1595 = vsel %vm121, %v1589, 0
    %v1598 = vsel %vm121, %v1590, 0
    %v1601 = vsel %vm121, %v1591, 0
    %1603 = vmatpush.msra.mxu0 0.0
    %1604 = vmatpush.msra.mxu0 0.0
    %1605 = vmatpush.msra.mxu0 0.0
    %1606 = vmatpush.msra.mxu0 0.0
    %1607 = vmatpush.msra.mxu0 0.0
    %1608 = vmatpush.msra.mxu0 0.0
    %1609 = vmatpush.msra.mxu0 0.0
    %1610 = vmatpush.msra.mxu0 0.0
    %1611 = vmatpush.msra.mxu0 0.0
    %1612 = vmatpush.msra.mxu0 0.0
    %1613 = vmatpush.msra.mxu0 0.0
    %1614 = vmatpush.msra.mxu0 0.0
    %1615 = vmatpush.msra.mxu0 0.0
    %1616 = vmatpush.msra.mxu0 0.0
    %1617 = vmatpush.msra.mxu0 %v1593
    %1618 = vmatpush.msra.mxu0 %v1592
    %1619 = vmatmul.f32.gmra.mxu0 %v1595
    %v1620 = vpop.f32.mrf.mxu0
    %v1621 = vadd.f32 0.0, %v1620
    %1622 = vmatmul.f32.gmra.mxu0 %v1598
    %v1623 = vpop.f32.mrf.mxu0
    %v1624 = vadd.f32 0.0, %v1623
    %1625 = vmatmul.f32.gmra.mxu0 %v1601
    %v1626 = vpop.f32.mrf.mxu0
    %v1627 = vadd.f32 0.0, %v1626
    %1628 = vdwg.mxu0
    %v1629 = vadd.f32 %v1557, %v1621
    %v1630 = vadd.f32 %v1558, %v1624
    %v1631 = vadd.f32 %v1559, %v1627
    %v1632 = vld [vmem:[%s0 + $0x18c] sm:$0xff]
    %v1633 = vld [vmem:[%s0 + $0x194] sm:$0xff]
    %v1634 = vld [vmem:[%s0 + $0x19c] sm:$0x3]
    %1635 = vmatpush.msra.mxu0 %v48
    %1636 = vmatpush.msra.mxu0 %v47
    %1637 = vmatpush.msra.mxu0 %v46
    %1638 = vmatpush.msra.mxu0 %v45
    %1639 = vmatpush.msra.mxu0 %v44
    %1640 = vmatpush.msra.mxu0 %v43
    %1641 = vmatpush.msra.mxu0 %v42
    %1642 = vmatpush.msra.mxu0 %v41
    %1643 = vmatpush.msra.mxu0 %v40
    %1644 = vmatpush.msra.mxu0 %v39
    %1645 = vmatpush.msra.mxu0 %v38
    %1646 = vmatpush.msra.mxu0 %v37
    %1647 = vmatpush.msra.mxu0 %v36
    %1648 = vmatpush.msra.mxu0 %v35
    %1649 = vmatpush.msra.mxu0 %v34
    %1650 = vmatpush.msra.mxu0 %v33
    %1651 = vmatmul.f32.gmra.mxu0 %v1632
    %v1652 = vpop.f32.mrf.mxu0
    %v1653 = vadd.f32 %v54, %v1652
    %1654 = vmatmul.f32.gmra.mxu0 %v1633
    %v1655 = vpop.f32.mrf.mxu0
    %v1656 = vadd.f32 %v54, %v1655
    %1657 = vmatmul.f32.gmra.mxu0 %v1634
    %v1658 = vpop.f32.mrf.mxu0
    %v1659 = vadd.f32 %v54, %v1658
    %1660 = vdwg.mxu0
    %v1661 = vmax.f32 %v1653, 0.0
    %v1662 = vmax.f32 %v1656, 0.0
    %v1663 = vmax.f32 %v1659, 0.0
    %v1664 = vld [vmem:[%s3 + $0x160] sm:$0xff]
    %v1665 = vld [vmem:[%s3 + $0x168] sm:$0xff]
    %v1667 = vsel %vm121, %v1661, 0
    %v1670 = vsel %vm121, %v1662, 0
    %v1673 = vsel %vm121, %v1663, 0
    %1675 = vmatpush.msra.mxu0 0.0
    %1676 = vmatpush.msra.mxu0 0.0
    %1677 = vmatpush.msra.mxu0 0.0
    %1678 = vmatpush.msra.mxu0 0.0
    %1679 = vmatpush.msra.mxu0 0.0
    %1680 = vmatpush.msra.mxu0 0.0
    %1681 = vmatpush.msra.mxu0 0.0
    %1682 = vmatpush.msra.mxu0 0.0
    %1683 = vmatpush.msra.mxu0 0.0
    %1684 = vmatpush.msra.mxu0 0.0
    %1685 = vmatpush.msra.mxu0 0.0
    %1686 = vmatpush.msra.mxu0 0.0
    %1687 = vmatpush.msra.mxu0 0.0
    %1688 = vmatpush.msra.mxu0 0.0
    %1689 = vmatpush.msra.mxu0 %v1665
    %1690 = vmatpush.msra.mxu0 %v1664
    %1691 = vmatmul.f32.gmra.mxu0 %v1667
    %v1692 = vpop.f32.mrf.mxu0
    %v1693 = vadd.f32 0.0, %v1692
    %1694 = vmatmul.f32.gmra.mxu0 %v1670
    %v1695 = vpop.f32.mrf.mxu0
    %v1696 = vadd.f32 0.0, %v1695
    %1697 = vmatmul.f32.gmra.mxu0 %v1673
    %v1698 = vpop.f32.mrf.mxu0
    %v1699 = vadd.f32 0.0, %v1698
    %1700 = vdwg.mxu0
    %v1701 = vadd.f32 %v1629, %v1693
    %v1702 = vadd.f32 %v1630, %v1696
    %v1703 = vadd.f32 %v1631, %v1699
    %v1704 = vld [vmem:[%s0 + $0x19e] sm:$0xff]
    %v1705 = vld [vmem:[%s0 + $0x1a6] sm:$0xff]
    %v1706 = vld [vmem:[%s0 + $0x1ae] sm:$0x3]
    %1707 = vmatpush.msra.mxu0 %v48
    %1708 = vmatpush.msra.mxu0 %v47
    %1709 = vmatpush.msra.mxu0 %v46
    %1710 = vmatpush.msra.mxu0 %v45
    %1711 = vmatpush.msra.mxu0 %v44
    %1712 = vmatpush.msra.mxu0 %v43
    %1713 = vmatpush.msra.mxu0 %v42
    %1714 = vmatpush.msra.mxu0 %v41
    %1715 = vmatpush.msra.mxu0 %v40
    %1716 = vmatpush.msra.mxu0 %v39
    %1717 = vmatpush.msra.mxu0 %v38
    %1718 = vmatpush.msra.mxu0 %v37
    %1719 = vmatpush.msra.mxu0 %v36
    %1720 = vmatpush.msra.mxu0 %v35
    %1721 = vmatpush.msra.mxu0 %v34
    %1722 = vmatpush.msra.mxu0 %v33
    %1723 = vmatmul.f32.gmra.mxu0 %v1704
    %v1724 = vpop.f32.mrf.mxu0
    %v1725 = vadd.f32 %v54, %v1724
    %1726 = vmatmul.f32.gmra.mxu0 %v1705
    %v1727 = vpop.f32.mrf.mxu0
    %v1728 = vadd.f32 %v54, %v1727
    %1729 = vmatmul.f32.gmra.mxu0 %v1706
    %v1730 = vpop.f32.mrf.mxu0
    %v1731 = vadd.f32 %v54, %v1730
    %1732 = vdwg.mxu0
    %v1733 = vmax.f32 %v1725, 0.0
    %v1734 = vmax.f32 %v1728, 0.0
    %v1735 = vmax.f32 %v1731, 0.0
    %v1736 = vld [vmem:[%s3 + $0x170] sm:$0xff]
    %v1737 = vld [vmem:[%s3 + $0x178] sm:$0xff]
    %v1739 = vsel %vm121, %v1733, 0
    %v1742 = vsel %vm121, %v1734, 0
    %v1745 = vsel %vm121, %v1735, 0
    %1747 = vmatpush.msra.mxu0 0.0
    %1748 = vmatpush.msra.mxu0 0.0
    %1749 = vmatpush.msra.mxu0 0.0
    %1750 = vmatpush.msra.mxu0 0.0
    %1751 = vmatpush.msra.mxu0 0.0
    %1752 = vmatpush.msra.mxu0 0.0
    %1753 = vmatpush.msra.mxu0 0.0
    %1754 = vmatpush.msra.mxu0 0.0
    %1755 = vmatpush.msra.mxu0 0.0
    %1756 = vmatpush.msra.mxu0 0.0
    %1757 = vmatpush.msra.mxu0 0.0
    %1758 = vmatpush.msra.mxu0 0.0
    %1759 = vmatpush.msra.mxu0 0.0
    %1760 = vmatpush.msra.mxu0 0.0
    %1761 = vmatpush.msra.mxu0 %v1737
    %1762 = vmatpush.msra.mxu0 %v1736
    %1763 = vmatmul.f32.gmra.mxu0 %v1739
    %v1764 = vpop.f32.mrf.mxu0
    %v1765 = vadd.f32 0.0, %v1764
    %1766 = vmatmul.f32.gmra.mxu0 %v1742
    %v1767 = vpop.f32.mrf.mxu0
    %v1768 = vadd.f32 0.0, %v1767
    %1769 = vmatmul.f32.gmra.mxu0 %v1745
    %v1770 = vpop.f32.mrf.mxu0
    %v1771 = vadd.f32 0.0, %v1770
    %1772 = vdwg.mxu0
    %v1773 = vadd.f32 %v1701, %v1765
    %v1774 = vadd.f32 %v1702, %v1768
    %v1775 = vadd.f32 %v1703, %v1771
    %v1776 = vld [vmem:[%s0 + $0x1b0] sm:$0xff]
    %v1777 = vld [vmem:[%s0 + $0x1b8] sm:$0xff]
    %v1778 = vld [vmem:[%s0 + $0x1c0] sm:$0x3]
    %1779 = vmatpush.msra.mxu0 %v48
    %1780 = vmatpush.msra.mxu0 %v47
    %1781 = vmatpush.msra.mxu0 %v46
    %1782 = vmatpush.msra.mxu0 %v45
    %1783 = vmatpush.msra.mxu0 %v44
    %1784 = vmatpush.msra.mxu0 %v43
    %1785 = vmatpush.msra.mxu0 %v42
    %1786 = vmatpush.msra.mxu0 %v41
    %1787 = vmatpush.msra.mxu0 %v40
    %1788 = vmatpush.msra.mxu0 %v39
    %1789 = vmatpush.msra.mxu0 %v38
    %1790 = vmatpush.msra.mxu0 %v37
    %1791 = vmatpush.msra.mxu0 %v36
    %1792 = vmatpush.msra.mxu0 %v35
    %1793 = vmatpush.msra.mxu0 %v34
    %1794 = vmatpush.msra.mxu0 %v33
    %1795 = vmatmul.f32.gmra.mxu0 %v1776
    %v1796 = vpop.f32.mrf.mxu0
    %v1797 = vadd.f32 %v54, %v1796
    %1798 = vmatmul.f32.gmra.mxu0 %v1777
    %v1799 = vpop.f32.mrf.mxu0
    %v1800 = vadd.f32 %v54, %v1799
    %1801 = vmatmul.f32.gmra.mxu0 %v1778
    %v1802 = vpop.f32.mrf.mxu0
    %v1803 = vadd.f32 %v54, %v1802
    %1804 = vdwg.mxu0
    %v1805 = vmax.f32 %v1797, 0.0
    %v1806 = vmax.f32 %v1800, 0.0
    %v1807 = vmax.f32 %v1803, 0.0
    %v1808 = vld [vmem:[%s3 + $0x180] sm:$0xff]
    %v1809 = vld [vmem:[%s3 + $0x188] sm:$0xff]
    %v1811 = vsel %vm121, %v1805, 0
    %v1814 = vsel %vm121, %v1806, 0
    %v1817 = vsel %vm121, %v1807, 0
    %1819 = vmatpush.msra.mxu0 0.0
    %1820 = vmatpush.msra.mxu0 0.0
    %1821 = vmatpush.msra.mxu0 0.0
    %1822 = vmatpush.msra.mxu0 0.0
    %1823 = vmatpush.msra.mxu0 0.0
    %1824 = vmatpush.msra.mxu0 0.0
    %1825 = vmatpush.msra.mxu0 0.0
    %1826 = vmatpush.msra.mxu0 0.0
    %1827 = vmatpush.msra.mxu0 0.0
    %1828 = vmatpush.msra.mxu0 0.0
    %1829 = vmatpush.msra.mxu0 0.0
    %1830 = vmatpush.msra.mxu0 0.0
    %1831 = vmatpush.msra.mxu0 0.0
    %1832 = vmatpush.msra.mxu0 0.0
    %1833 = vmatpush.msra.mxu0 %v1809
    %1834 = vmatpush.msra.mxu0 %v1808
    %1835 = vmatmul.f32.gmra.mxu0 %v1811
    %v1836 = vpop.f32.mrf.mxu0
    %v1837 = vadd.f32 0.0, %v1836
    %1838 = vmatmul.f32.gmra.mxu0 %v1814
    %v1839 = vpop.f32.mrf.mxu0
    %v1840 = vadd.f32 0.0, %v1839
    %1841 = vmatmul.f32.gmra.mxu0 %v1817
    %v1842 = vpop.f32.mrf.mxu0
    %v1843 = vadd.f32 0.0, %v1842
    %1844 = vdwg.mxu0
    %v1845 = vadd.f32 %v1773, %v1837
    %v1846 = vadd.f32 %v1774, %v1840
    %v1847 = vadd.f32 %v1775, %v1843
    %v1848 = vld [vmem:[%s4] sm:$0x1]
    %v1850 = vperm.slane %v1848, 0
    %v1852 = vadd.f32 %v1845, %v1850
    %v1853 = vadd.f32 %v1846, %v1850
    %v1854 = vadd.f32 %v1847, %v1850
    %v1855 = vmax.f32 %v1852, 0.0
    %v1856 = vmax.f32 %v1853, 0.0
    %v1857 = vmax.f32 %v1854, 0.0
    %vm1858 = vcmask 261120
    %1859 = vst.msk [vmem:[#allocation2] sm:$0xff] %vm1858, %v1855
    %1860 = vst.msk [vmem:[#allocation2 + $0x8] sm:$0xff] %vm1858, %v1856
    %vm1861 = vcmask 254976
    %1862 = vst.msk [vmem:[#allocation2 + $0x10] sm:$0x3] %vm1861, %v1857
    %v1863 = vld [vmem:[#allocation2] sm:$0x3]
    %v1864 = vld [vmem:[%s5] sm:$0xff]
    %v1865 = vld [vmem:[%s5 + $0x8] sm:$0xff]
    %v1866 = vld [vmem:[%s5 + $0x10] sm:$0xff]
    %v1867 = vld [vmem:[%s5 + $0x18] sm:$0xff]
    %v1868 = vld [vmem:[#allocation2 + $0x2] sm:$0x3]
    %v1869 = vld [vmem:[%s5 + $0x20] sm:$0xff]
    %v1870 = vld [vmem:[%s5 + $0x28] sm:$0xff]
    %v1871 = vld [vmem:[%s5 + $0x30] sm:$0xff]
    %v1872 = vld [vmem:[%s5 + $0x38] sm:$0xff]
    %v1874 = vsel %vm1858, %v1868, 0
    %1876 = vmatpush.msra.mxu0 0.0
    %1877 = vmatpush.msra.mxu0 0.0
    %1878 = vmatpush.msra.mxu0 0.0
    %1879 = vmatpush.msra.mxu0 0.0
    %1880 = vmatpush.msra.mxu0 0.0
    %1881 = vmatpush.msra.mxu0 0.0
    %1882 = vmatpush.msra.mxu0 0.0
    %1883 = vmatpush.msra.mxu0 0.0
    %1884 = vmatpush.msra.mxu0 0.0
    %1885 = vmatpush.msra.mxu0 0.0
    %1886 = vmatpush.msra.mxu0 0.0
    %1887 = vmatpush.msra.mxu0 0.0
    %1888 = vmatpush.msra.mxu0 %v1872
    %1889 = vmatpush.msra.mxu0 %v1871
    %1890 = vmatpush.msra.mxu0 %v1870
    %1891 = vmatpush.msra.mxu0 %v1869
    %1892 = vmatmul.f32.gmra.mxu0 %v1874
    %v1893 = vpop.f32.mrf.mxu0
    %v1894 = vadd.f32 0.0, %v1893
    %1895 = vdwg.mxu0
    %v1897 = vsel %vm1858, %v1863, 0
    %1899 = vmatpush.msra.mxu0 0.0
    %1900 = vmatpush.msra.mxu0 0.0
    %1901 = vmatpush.msra.mxu0 0.0
    %1902 = vmatpush.msra.mxu0 0.0
    %1903 = vmatpush.msra.mxu0 0.0
    %1904 = vmatpush.msra.mxu0 0.0
    %1905 = vmatpush.msra.mxu0 0.0
    %1906 = vmatpush.msra.mxu0 0.0
    %1907 = vmatpush.msra.mxu0 0.0
    %1908 = vmatpush.msra.mxu0 0.0
    %1909 = vmatpush.msra.mxu0 0.0
    %1910 = vmatpush.msra.mxu0 0.0
    %1911 = vmatpush.msra.mxu0 %v1867
    %1912 = vmatpush.msra.mxu0 %v1866
    %1913 = vmatpush.msra.mxu0 %v1865
    %1914 = vmatpush.msra.mxu0 %v1864
    %1915 = vmatmul.f32.gmra.mxu0 %v1897
    %v1916 = vpop.f32.mrf.mxu0
    %v1917 = vadd.f32 %v1894, %v1916
    %1918 = vdwg.mxu0
    %v1919 = vld [vmem:[#allocation2 + $0x4] sm:$0x3]
    %v1920 = vld [vmem:[%s5 + $0x40] sm:$0xff]
    %v1921 = vld [vmem:[%s5 + $0x48] sm:$0xff]
    %v1922 = vld [vmem:[%s5 + $0x50] sm:$0xff]
    %v1923 = vld [vmem:[%s5 + $0x58] sm:$0xff]
    %v1925 = vsel %vm1858, %v1919, 0
    %1927 = vmatpush.msra.mxu0 0.0
    %1928 = vmatpush.msra.mxu0 0.0
    %1929 = vmatpush.msra.mxu0 0.0
    %1930 = vmatpush.msra.mxu0 0.0
    %1931 = vmatpush.msra.mxu0 0.0
    %1932 = vmatpush.msra.mxu0 0.0
    %1933 = vmatpush.msra.mxu0 0.0
    %1934 = vmatpush.msra.mxu0 0.0
    %1935 = vmatpush.msra.mxu0 0.0
    %1936 = vmatpush.msra.mxu0 0.0
    %1937 = vmatpush.msra.mxu0 0.0
    %1938 = vmatpush.msra.mxu0 0.0
    %1939 = vmatpush.msra.mxu0 %v1923
    %1940 = vmatpush.msra.mxu0 %v1922
    %1941 = vmatpush.msra.mxu0 %v1921
    %1942 = vmatpush.msra.mxu0 %v1920
    %1943 = vmatmul.f32.gmra.mxu0 %v1925
    %v1944 = vpop.f32.mrf.mxu0
    %v1945 = vadd.f32 0.0, %v1944
    %1946 = vdwg.mxu0
    %v1947 = vadd.f32 %v1917, %v1945
    %v1948 = vld [vmem:[#allocation2 + $0x6] sm:$0x3]
    %v1949 = vld [vmem:[%s5 + $0x60] sm:$0xff]
    %v1950 = vld [vmem:[%s5 + $0x68] sm:$0xff]
    %v1951 = vld [vmem:[%s5 + $0x70] sm:$0xff]
    %v1952 = vld [vmem:[%s5 + $0x78] sm:$0xff]
    %v1954 = vsel %vm1858, %v1948, 0
    %1956 = vmatpush.msra.mxu0 0.0
    %1957 = vmatpush.msra.mxu0 0.0
    %1958 = vmatpush.msra.mxu0 0.0
    %1959 = vmatpush.msra.mxu0 0.0
    %1960 = vmatpush.msra.mxu0 0.0
    %1961 = vmatpush.msra.mxu0 0.0
    %1962 = vmatpush.msra.mxu0 0.0
    %1963 = vmatpush.msra.mxu0 0.0
    %1964 = vmatpush.msra.mxu0 0.0
    %1965 = vmatpush.msra.mxu0 0.0
    %1966 = vmatpush.msra.mxu0 0.0
    %1967 = vmatpush.msra.mxu0 0.0
    %1968 = vmatpush.msra.mxu0 %v1952
    %1969 = vmatpush.msra.mxu0 %v1951
    %1970 = vmatpush.msra.mxu0 %v1950
    %1971 = vmatpush.msra.mxu0 %v1949
    %1972 = vmatmul.f32.gmra.mxu0 %v1954
    %v1973 = vpop.f32.mrf.mxu0
    %v1974 = vadd.f32 0.0, %v1973
    %1975 = vdwg.mxu0
    %v1976 = vadd.f32 %v1947, %v1974
    %v1977 = vld [vmem:[#allocation2 + $0x8] sm:$0x3]
    %v1978 = vld [vmem:[%s5 + $0x80] sm:$0xff]
    %v1979 = vld [vmem:[%s5 + $0x88] sm:$0xff]
    %v1980 = vld [vmem:[%s5 + $0x90] sm:$0xff]
    %v1981 = vld [vmem:[%s5 + $0x98] sm:$0xff]
    %v1983 = vsel %vm1858, %v1977, 0
    %1985 = vmatpush.msra.mxu0 0.0
    %1986 = vmatpush.msra.mxu0 0.0
    %1987 = vmatpush.msra.mxu0 0.0
    %1988 = vmatpush.msra.mxu0 0.0
    %1989 = vmatpush.msra.mxu0 0.0
    %1990 = vmatpush.msra.mxu0 0.0
    %1991 = vmatpush.msra.mxu0 0.0
    %1992 = vmatpush.msra.mxu0 0.0
    %1993 = vmatpush.msra.mxu0 0.0
    %1994 = vmatpush.msra.mxu0 0.0
    %1995 = vmatpush.msra.mxu0 0.0
    %1996 = vmatpush.msra.mxu0 0.0
    %1997 = vmatpush.msra.mxu0 %v1981
    %1998 = vmatpush.msra.mxu0 %v1980
    %1999 = vmatpush.msra.mxu0 %v1979
    %2000 = vmatpush.msra.mxu0 %v1978
    %2001 = vmatmul.f32.gmra.mxu0 %v1983
    %v2002 = vpop.f32.mrf.mxu0
    %v2003 = vadd.f32 0.0, %v2002
    %2004 = vdwg.mxu0
    %v2005 = vadd.f32 %v1976, %v2003
    %v2006 = vld [vmem:[#allocation2 + $0xa] sm:$0x3]
    %v2007 = vld [vmem:[%s5 + $0xa0] sm:$0xff]
    %v2008 = vld [vmem:[%s5 + $0xa8] sm:$0xff]
    %v2009 = vld [vmem:[%s5 + $0xb0] sm:$0xff]
    %v2010 = vld [vmem:[%s5 + $0xb8] sm:$0xff]
    %v2012 = vsel %vm1858, %v2006, 0
    %2014 = vmatpush.msra.mxu0 0.0
    %2015 = vmatpush.msra.mxu0 0.0
    %2016 = vmatpush.msra.mxu0 0.0
    %2017 = vmatpush.msra.mxu0 0.0
    %2018 = vmatpush.msra.mxu0 0.0
    %2019 = vmatpush.msra.mxu0 0.0
    %2020 = vmatpush.msra.mxu0 0.0
    %2021 = vmatpush.msra.mxu0 0.0
    %2022 = vmatpush.msra.mxu0 0.0
    %2023 = vmatpush.msra.mxu0 0.0
    %2024 = vmatpush.msra.mxu0 0.0
    %2025 = vmatpush.msra.mxu0 0.0
    %2026 = vmatpush.msra.mxu0 %v2010
    %2027 = vmatpush.msra.mxu0 %v2009
    %2028 = vmatpush.msra.mxu0 %v2008
    %2029 = vmatpush.msra.mxu0 %v2007
    %2030 = vmatmul.f32.gmra.mxu0 %v2012
    %v2031 = vpop.f32.mrf.mxu0
    %v2032 = vadd.f32 0.0, %v2031
    %2033 = vdwg.mxu0
    %v2034 = vadd.f32 %v2005, %v2032
    %v2035 = vld [vmem:[#allocation2 + $0xc] sm:$0x3]
    %v2036 = vld [vmem:[%s5 + $0xc0] sm:$0xff]
    %v2037 = vld [vmem:[%s5 + $0xc8] sm:$0xff]
    %v2038 = vld [vmem:[%s5 + $0xd0] sm:$0xff]
    %v2039 = vld [vmem:[%s5 + $0xd8] sm:$0xff]
    %v2041 = vsel %vm1858, %v2035, 0
    %2043 = vmatpush.msra.mxu0 0.0
    %2044 = vmatpush.msra.mxu0 0.0
    %2045 = vmatpush.msra.mxu0 0.0
    %2046 = vmatpush.msra.mxu0 0.0
    %2047 = vmatpush.msra.mxu0 0.0
    %2048 = vmatpush.msra.mxu0 0.0
    %2049 = vmatpush.msra.mxu0 0.0
    %2050 = vmatpush.msra.mxu0 0.0
    %2051 = vmatpush.msra.mxu0 0.0
    %2052 = vmatpush.msra.mxu0 0.0
    %2053 = vmatpush.msra.mxu0 0.0
    %2054 = vmatpush.msra.mxu0 0.0
    %2055 = vmatpush.msra.mxu0 %v2039
    %2056 = vmatpush.msra.mxu0 %v2038
    %2057 = vmatpush.msra.mxu0 %v2037
    %2058 = vmatpush.msra.mxu0 %v2036
    %2059 = vmatmul.f32.gmra.mxu0 %v2041
    %v2060 = vpop.f32.mrf.mxu0
    %v2061 = vadd.f32 0.0, %v2060
    %2062 = vdwg.mxu0
    %v2063 = vadd.f32 %v2034, %v2061
    %v2064 = vld [vmem:[#allocation2 + $0xe] sm:$0x3]
    %v2065 = vld [vmem:[%s5 + $0xe0] sm:$0xff]
    %v2066 = vld [vmem:[%s5 + $0xe8] sm:$0xff]
    %v2067 = vld [vmem:[%s5 + $0xf0] sm:$0xff]
    %v2068 = vld [vmem:[%s5 + $0xf8] sm:$0xff]
    %v2070 = vsel %vm1858, %v2064, 0
    %2072 = vmatpush.msra.mxu0 0.0
    %2073 = vmatpush.msra.mxu0 0.0
    %2074 = vmatpush.msra.mxu0 0.0
    %2075 = vmatpush.msra.mxu0 0.0
    %2076 = vmatpush.msra.mxu0 0.0
    %2077 = vmatpush.msra.mxu0 0.0
    %2078 = vmatpush.msra.mxu0 0.0
    %2079 = vmatpush.msra.mxu0 0.0
    %2080 = vmatpush.msra.mxu0 0.0
    %2081 = vmatpush.msra.mxu0 0.0
    %2082 = vmatpush.msra.mxu0 0.0
    %2083 = vmatpush.msra.mxu0 0.0
    %2084 = vmatpush.msra.mxu0 %v2068
    %2085 = vmatpush.msra.mxu0 %v2067
    %2086 = vmatpush.msra.mxu0 %v2066
    %2087 = vmatpush.msra.mxu0 %v2065
    %2088 = vmatmul.f32.gmra.mxu0 %v2070
    %v2089 = vpop.f32.mrf.mxu0
    %v2090 = vadd.f32 0.0, %v2089
    %2091 = vdwg.mxu0
    %v2092 = vadd.f32 %v2063, %v2090
    %v2093 = vld [vmem:[#allocation2 + $0x10] sm:$0x3]
    %v2094 = vld [vmem:[%s5 + $0x100] sm:$0xff]
    %v2095 = vld [vmem:[%s5 + $0x108] sm:$0xff]
    %v2096 = vld [vmem:[%s5 + $0x110] sm:$0xff]
    %v2097 = vld [vmem:[%s5 + $0x118] sm:$0xff]
    %v2099 = vsel %vm1858, %v2093, 0
    %2101 = vmatpush.msra.mxu0 0.0
    %2102 = vmatpush.msra.mxu0 0.0
    %2103 = vmatpush.msra.mxu0 0.0
    %2104 = vmatpush.msra.mxu0 0.0
    %2105 = vmatpush.msra.mxu0 0.0
    %2106 = vmatpush.msra.mxu0 0.0
    %2107 = vmatpush.msra.mxu0 0.0
    %2108 = vmatpush.msra.mxu0 0.0
    %2109 = vmatpush.msra.mxu0 0.0
    %2110 = vmatpush.msra.mxu0 0.0
    %2111 = vmatpush.msra.mxu0 0.0
    %2112 = vmatpush.msra.mxu0 0.0
    %2113 = vmatpush.msra.mxu0 %v2097
    %2114 = vmatpush.msra.mxu0 %v2096
    %2115 = vmatpush.msra.mxu0 %v2095
    %2116 = vmatpush.msra.mxu0 %v2094
    %2117 = vmatmul.f32.gmra.mxu0 %v2099
    %v2118 = vpop.f32.mrf.mxu0
    %v2119 = vadd.f32 0.0, %v2118
    %2120 = vdwg.mxu0
    %v2121 = vadd.f32 %v2092, %v2119
    %v2122 = vld [vmem:[%s6] sm:$0x1]
    %v2124 = vperm.slane %v2122, 0
    %v2126 = vadd.f32 %v2121, %v2124
    %v2127 = vmax.f32 %v2126, 0.0
    %v2128 = vld [vmem:[%s7] sm:$0xff]
    %v2129 = vld [vmem:[%s7 + $0x8] sm:$0xff]
    %v2130 = vld [vmem:[%s7 + $0x10] sm:$0xff]
    %v2131 = vld [vmem:[%s7 + $0x18] sm:$0xff]
    %v2132 = vld [vmem:[%s7 + $0x20] sm:$0xff]
    %v2133 = vld [vmem:[%s7 + $0x28] sm:$0xff]
    %v2134 = vld [vmem:[%s7 + $0x30] sm:$0xff]
    %v2135 = vld [vmem:[%s7 + $0x38] sm:$0xff]
    %v2136 = vld [vmem:[%s8] sm:$0x1]
    %v2138 = vperm.slane %v2136, 0
    %vm2140 = vcmask 523264
    %v2142 = vsel %vm2140, %v2127, 0
    %2144 = vmatpush.msra.mxu0 0.0
    %2145 = vmatpush.msra.mxu0 0.0
    %2146 = vmatpush.msra.mxu0 0.0
    %2147 = vmatpush.msra.mxu0 0.0
    %2148 = vmatpush.msra.mxu0 0.0
    %2149 = vmatpush.msra.mxu0 0.0
    %2150 = vmatpush.msra.mxu0 0.0
    %2151 = vmatpush.msra.mxu0 0.0
    %2152 = vmatpush.msra.mxu0 %v2135
    %2153 = vmatpush.msra.mxu0 %v2134
    %2154 = vmatpush.msra.mxu0 %v2133
    %2155 = vmatpush.msra.mxu0 %v2132
    %2156 = vmatpush.msra.mxu0 %v2131
    %2157 = vmatpush.msra.mxu0 %v2130
    %2158 = vmatpush.msra.mxu0 %v2129
    %2159 = vmatpush.msra.mxu0 %v2128
    %2160 = vmatmul.f32.gmra.mxu0 %v2142
    %v2161 = vpop.f32.mrf.mxu0
    %v2162 = vadd.f32 %v2138, %v2161
    %2163 = vdwg.mxu0
    %2164 = vst.msk [vmem:[#allocation3] sm:$0x3] %vm1861, %v2162
    // Predicated region
    $region38: #{cnn_feature_extractor_forward.1} parent=1 // pred_check
      _
    $region39: #{cnn_feature_extractor_forward.1} parent=1 // pred_check_branch
      %2166 = sbr.rel (0) target = $region41
    $region40: #{cnn_feature_extractor_forward.1} parent=1 // pred_region
      %2168 = vsyncadd [#allocation4], 0
      %s2170 = sshll.u32 [#allocation3], 4
      %s2171 = int_to_ptr.vmem [resolvable:$true] %s2170
      %s2172 = sshll.u32 %s9, 4
      %s2173 = int_to_ptr.hbm [resolvable:$true] %s2172
      %2175 = dma.vmem_to_hbm [thread:$0]  %s2171, 32, %s2173, [#allocation4]
    $region41: #{cnn_feature_extractor_forward.1} parent=1 // pred_fallthru
      _
    // Predicated region
    $region42: #{cnn_feature_extractor_forward.1} parent=1 // pred_check
      _
    $region43: #{cnn_feature_extractor_forward.1} parent=1 // pred_check_branch
      %2177 = sbr.rel (0) target = $region45
    $region44: #{cnn_feature_extractor_forward.1} parent=1 // pred_region
      %2179 = dma.done [#allocation4], 32
    $region45: #{cnn_feature_extractor_forward.1} parent=1 // pred_fallthru
      _
    %2180 = vsyncpa [#allocation4], 1

</llo_original>
